<compile_context>
chip_gen: v7x
topology: tpu7x:2x2x1
jax: 0.10.0
libtpu: 0.0.40
codegen_flags: <defaults>
</compile_context>

<pallas_src>
import jax
import jax.numpy as jnp
from jax import lax
from jax.experimental import pallas as pl
from jax.experimental.pallas import tpu as pltpu

# ---------------- tiny "hf_model" config ----------------
B = 2             # batch
S = 8             # sequence length
H = 32            # hidden size
NUM_HEADS = 1     # single attention head (head_dim == H)
FFN = 64          # intermediate size
VOCAB = 100       # vocab size
NUM_LABELS = 2    # sequence-classification labels
NUM_LAYERS = 2    # encoder layers
EPS = 1e-5
QP = 128          # per-Q/K/V lane-padded width (lane-group aligned slices)
LOGIT_PAD = 128   # lane-dense logits slab width (>= NUM_LABELS, multiple of 128)
NEG = -1e9


# ---------------- in-kernel helpers ----------------
def _layernorm(x, gamma, beta):
    # Two independent reductions (sum, sum of squares) -> they pipeline on the
    # XLU, instead of the serialized mean -> (x-mean)^2 -> mean chain.
    inv_n = 1.0 / x.shape[-1]
    s1 = jnp.sum(x, axis=-1, keepdims=True)
    s2 = jnp.sum(x * x, axis=-1, keepdims=True)
    mean = s1 * inv_n
    var = s2 * inv_n - mean * mean
    return (x - mean) * lax.rsqrt(var + EPS) * gamma + beta


# ---------------- fused Pallas kernel (whole forward pass) ----------------
def fused_forward_kernel(tok_ref, pos_ref, keybias_ref, blockdiag_ref,
                         eg_ref, eb_ref,
                         wqkv_ref, bqkv_ref, wo_ref, bo_ref,
                         ln1g_ref, ln1b_ref, w1_ref, b1_ref,
                         w2_ref, b2_ref, ln2g_ref, ln2b_ref,
                         pw_ref, pb_ref, cw_ref, cb_ref,
                         o_ref):
    # Embeddings: token + position add on the VPU, then embedding layernorm.
    x = tok_ref[...] + pos_ref[...][None, :, :]                       # (B, S, H)
    x2 = _layernorm(x.reshape(B * S, H), eg_ref[...], eb_ref[...])    # (B*S, H)

    # Additive attention bias over the merged (B*S, B*S) score matrix:
    # block-diagonal constant (no cross-batch attention) + key-padding bias.
    # Built once, reused by every layer.
    bias = blockdiag_ref[...] + keybias_ref[...]                      # (B*S, B*S)

    # Static unroll over stacked layer weights (NUM_LAYERS leading axis).
    for li in range(NUM_LAYERS):
        # One fused QKV matmul; Q/K/V blocks zero-padded to 128 output lanes so
        # the slices below sit on lane-group boundaries (no XLU realign).
        qkv = jnp.dot(x2, wqkv_ref[li],
                      preferred_element_type=jnp.float32) + bqkv_ref[li]   # (B*S, 3*QP)
        q = qkv[:, 0 * QP:1 * QP]                                          # (B*S, QP)
        k = qkv[:, 1 * QP:2 * QP]
        v = qkv[:, 2 * QP:3 * QP]

        # Whole-batch attention in one matmul: q @ k^T (+ block-diag/key bias).
        # 1/sqrt(head_dim) is folded into the Q weight columns at init time.
        scores = lax.dot_general(q, k, (((1,), (1,)), ((), ())),
                                 preferred_element_type=jnp.float32) + bias  # (B*S, B*S)
        # No max-subtraction: unmasked scores are bounded at this scale and the
        # -1e9 masked entries underflow exp() to exactly 0 in f32.
        p = jnp.exp(scores)
        p = p * pl.reciprocal(jnp.sum(p, axis=-1, keepdims=True), approx=True)

        ctx = jnp.dot(p, v, preferred_element_type=jnp.float32)             # (B*S, QP)
        attn = jnp.dot(ctx, wo_ref[li],
                       preferred_element_type=jnp.float32) + bo_ref[li]     # (B*S, H)
        h1 = _layernorm(x2 + attn, ln1g_ref[li], ln1b_ref[li])

        ff = jnp.dot(h1, w1_ref[li], preferred_element_type=jnp.float32) + b1_ref[li]
        # TODO(synk): HF BERT default 'gelu' is the exact erf form; tanh approx here.
        ff = jax.nn.gelu(ff, approximate=True)
        ff = jnp.dot(ff, w2_ref[li], preferred_element_type=jnp.float32) + b2_ref[li]
        x2 = _layernorm(h1 + ff, ln2g_ref[li], ln2b_ref[li])

    # [CLS] pooling: sublane-aligned slice of the (B, S, H) view.
    cls = x2.reshape(B, S, H)[:, 0, :]                                       # (B, H)
    pooled = jnp.tanh(jnp.dot(cls, pw_ref[...],
                              preferred_element_type=jnp.float32) + pb_ref[...])
    # Lane-dense logits store: (B, 128); real logits in columns [:NUM_LABELS].
    o_ref[...] = jnp.dot(pooled, cw_ref[...],
                         preferred_element_type=jnp.float32) + cb_ref[...]


# ---------------- parameter init (deterministic, synthetic) ----------------
def init_params(key):
    def normal(k, shape, scale=0.02):
        return (scale * jax.random.normal(k, shape)).astype(jnp.float32)

    keys = jax.random.split(key, 8 + NUM_LAYERS)
    attn_scale = 1.0 / float(H // NUM_HEADS) ** 0.5

    cls_w = normal(keys[3], (H, NUM_LABELS))
    cls_w_pad = jnp.zeros((H, LOGIT_PAD), jnp.float32).at[:, :NUM_LABELS].set(cls_w)

    # Block-diagonal additive bias (no cross-batch attention), built once at init.
    rb = jnp.arange(B * S) // S
    blockdiag = jnp.where(rb[:, None] == rb[None, :], 0.0, NEG).astype(jnp.float32)

    params = {
        "tok_emb": normal(keys[0], (VOCAB, H)),
        "pos_emb": normal(keys[1], (S, H)),
        "blockdiag": blockdiag,
        "emb_ln_g": jnp.ones((1, H), jnp.float32),
        "emb_ln_b": jnp.zeros((1, H), jnp.float32),
        "pool_w": normal(keys[2], (H, H)),
        "pool_b": jnp.zeros((1, H), jnp.float32),
        "cls_w_pad": cls_w_pad,
        "cls_b_pad": jnp.zeros((1, LOGIT_PAD), jnp.float32),
    }

    def pad_lanes(w):  # (H, H) -> (H, QP), zero-padded output lanes
        return jnp.zeros((H, QP), jnp.float32).at[:, :H].set(w)

    wqkv, bqkv, wo, bo = [], [], [], []
    ln1g, ln1b, w1, b1, w2, b2, ln2g, ln2b = [], [], [], [], [], [], [], []
    for li in range(NUM_LAYERS):
        lk = jax.random.split(keys[8 + li], 6)
        wq = normal(lk[0], (H, H)) * attn_scale     # 1/sqrt(head_dim) folded in
        wk = normal(lk[1], (H, H))
        wv = normal(lk[2], (H, H))
        wqkv.append(jnp.concatenate(
            [pad_lanes(wq), pad_lanes(wk), pad_lanes(wv)], axis=1))   # (H, 3*QP)
        bqkv.append(jnp.zeros((1, 3 * QP), jnp.float32))
        wo_pad = jnp.zeros((QP, H), jnp.float32).at[:H, :].set(normal(lk[3], (H, H)))
        wo.append(wo_pad)
        bo.append(jnp.zeros((1, H), jnp.float32))
        ln1g.append(jnp.ones((1, H), jnp.float32))
        ln1b.append(jnp.zeros((1, H), jnp.float32))
        w1.append(normal(lk[4], (H, FFN)))
        b1.append(jnp.zeros((1, FFN), jnp.float32))
        w2.append(normal(lk[5], (FFN, H)))
        b2.append(jnp.zeros((1, H), jnp.float32))
        ln2g.append(jnp.ones((1, H), jnp.float32))
        ln2b.append(jnp.zeros((1, H), jnp.float32))

    stack = lambda xs: jnp.stack(xs, axis=0)
    params.update({
        "wqkv": stack(wqkv), "bqkv": stack(bqkv),
        "wo": stack(wo), "bo": stack(bo),
        "ln1_g": stack(ln1g), "ln1_b": stack(ln1b),
        "w1": stack(w1), "b1": stack(b1),
        "w2": stack(w2), "b2": stack(b2),
        "ln2_g": stack(ln2g), "ln2_b": stack(ln2b),
    })
    return params


# ---------------- CrossEncoder.forward equivalent ----------------
def cross_encoder_forward(params, input_ids, attention_mask):
    """Returns SequenceClassifierOutput.logits, shape (B, NUM_LABELS)."""
    # Token-embedding gather stays in plain JAX glue (data-dependent gather).
    tok = params["tok_emb"][input_ids].astype(jnp.float32)              # (B, S, H)
    # Key-padding additive bias over the flattened key axis: 0 / -1e9.
    key_bias = (attention_mask.astype(jnp.float32).reshape(1, B * S) - 1.0) * 1e9

    args = (tok, params["pos_emb"], key_bias, params["blockdiag"],
            params["emb_ln_g"], params["emb_ln_b"],
            params["wqkv"], params["bqkv"], params["wo"], params["bo"],
            params["ln1_g"], params["ln1_b"], params["w1"], params["b1"],
            params["w2"], params["b2"], params["ln2_g"], params["ln2_b"],
            params["pool_w"], params["pool_b"],
            params["cls_w_pad"], params["cls_b_pad"])

    vmem_spec = pl.BlockSpec(memory_space=pltpu.MemorySpace.VMEM)
    logits_pad = pl.pallas_call(
        fused_forward_kernel,
        out_shape=jax.ShapeDtypeStruct((B, LOGIT_PAD), jnp.float32),
        in_specs=[vmem_spec] * len(args),     # whole-array VMEM resident, no grid
        out_specs=vmem_spec,
    )(*args)

    # TODO(synk): CrossEncoder defines nn.CrossEntropyLoss but forward() never applies it
    # (loss comes from the HF head only when labels are passed); we return logits.
    return logits_pad[:, :NUM_LABELS]


if __name__ == "__main__":
    key = jax.random.PRNGKey(0)
    pkey, ikey = jax.random.split(key)
    params = init_params(pkey)

    input_ids = jax.random.randint(ikey, (B, S), 0, VOCAB, dtype=jnp.int32)
    attention_mask = jnp.ones((B, S), jnp.int32).at[1, S - 2:].set(0)  # pad tail of row 1

    logits = cross_encoder_forward(params, input_ids, attention_mask)
    jax.block_until_ready(logits)
    assert logits.shape == (B, NUM_LABELS) and logits.dtype == jnp.float32
    assert bool(jnp.all(jnp.isfinite(logits)))
    print("KERNEL_OK")
</pallas_src>

<mosaic_0001>
module attributes {stable_mosaic.version = 11 : i64} {
  func.func @fused_forward_kernel(%arg0: memref<2x8x32xf32, #tpu.memory_space<vmem>>, %arg1: memref<8x32xf32, #tpu.memory_space<vmem>>, %arg2: memref<1x16xf32, #tpu.memory_space<vmem>>, %arg3: memref<16x16xf32, #tpu.memory_space<vmem>>, %arg4: memref<1x32xf32, #tpu.memory_space<vmem>>, %arg5: memref<1x32xf32, #tpu.memory_space<vmem>>, %arg6: memref<2x32x384xf32, #tpu.memory_space<vmem>>, %arg7: memref<2x1x384xf32, #tpu.memory_space<vmem>>, %arg8: memref<2x128x32xf32, #tpu.memory_space<vmem>>, %arg9: memref<2x1x32xf32, #tpu.memory_space<vmem>>, %arg10: memref<2x1x32xf32, #tpu.memory_space<vmem>>, %arg11: memref<2x1x32xf32, #tpu.memory_space<vmem>>, %arg12: memref<2x32x64xf32, #tpu.memory_space<vmem>>, %arg13: memref<2x1x64xf32, #tpu.memory_space<vmem>>, %arg14: memref<2x64x32xf32, #tpu.memory_space<vmem>>, %arg15: memref<2x1x32xf32, #tpu.memory_space<vmem>>, %arg16: memref<2x1x32xf32, #tpu.memory_space<vmem>>, %arg17: memref<2x1x32xf32, #tpu.memory_space<vmem>>, %arg18: memref<32x32xf32, #tpu.memory_space<vmem>>, %arg19: memref<1x32xf32, #tpu.memory_space<vmem>>, %arg20: memref<32x128xf32, #tpu.memory_space<vmem>>, %arg21: memref<1x128xf32, #tpu.memory_space<vmem>>, %arg22: memref<2x128xf32, #tpu.memory_space<vmem>>) attributes {dimension_semantics = [], scalar_prefetch = 0 : i64, scratch_operands = 0 : i64, tpu.core_type = #tpu.core_type<tc>} {
    %c0 = arith.constant 0 : index
    %c0_0 = arith.constant 0 : index
    %c0_1 = arith.constant 0 : index
    %0 = vector.load %arg0[%c0, %c0_0, %c0_1] : memref<2x8x32xf32, #tpu.memory_space<vmem>>, vector<2x8x32xf32>
    %c0_2 = arith.constant 0 : index
    %c0_3 = arith.constant 0 : index
    %1 = vector.load %arg1[%c0_2, %c0_3] : memref<8x32xf32, #tpu.memory_space<vmem>>, vector<8x32xf32>
    %2 = vector.shape_cast %1 : vector<8x32xf32> to vector<1x8x32xf32>
    %3 = vector.broadcast %2 : vector<1x8x32xf32> to vector<2x8x32xf32>
    %4 = arith.addf %0, %3 : vector<2x8x32xf32>
    %5 = vector.shape_cast %4 : vector<2x8x32xf32> to vector<16x32xf32>
    %c0_4 = arith.constant 0 : index
    %c0_5 = arith.constant 0 : index
    %6 = vector.load %arg4[%c0_4, %c0_5] : memref<1x32xf32, #tpu.memory_space<vmem>>, vector<1x32xf32>
    %c0_6 = arith.constant 0 : index
    %c0_7 = arith.constant 0 : index
    %7 = vector.load %arg5[%c0_6, %c0_7] : memref<1x32xf32, #tpu.memory_space<vmem>>, vector<1x32xf32>
    %cst = arith.constant dense<0.000000e+00> : vector<16xf32>
    %8 = vector.multi_reduction <add>, %5, %cst [1] : vector<16x32xf32> to vector<16xf32>
    %9 = vector.shape_cast %8 : vector<16xf32> to vector<16x1xf32>
    %10 = arith.mulf %5, %5 : vector<16x32xf32>
    %cst_8 = arith.constant dense<0.000000e+00> : vector<16xf32>
    %11 = vector.multi_reduction <add>, %10, %cst_8 [1] : vector<16x32xf32> to vector<16xf32>
    %12 = vector.shape_cast %11 : vector<16xf32> to vector<16x1xf32>
    %cst_9 = arith.constant 3.125000e-02 : f32
    %13 = vector.broadcast %cst_9 : f32 to vector<16x1xf32>
    %14 = arith.mulf %9, %13 : vector<16x1xf32>
    %cst_10 = arith.constant 3.125000e-02 : f32
    %15 = vector.broadcast %cst_10 : f32 to vector<16x1xf32>
    %16 = arith.mulf %12, %15 : vector<16x1xf32>
    %17 = arith.mulf %14, %14 : vector<16x1xf32>
    %18 = arith.subf %16, %17 : vector<16x1xf32>
    %19 = vector.broadcast %14 : vector<16x1xf32> to vector<16x32xf32>
    %20 = arith.subf %5, %19 : vector<16x32xf32>
    %cst_11 = arith.constant 9.99999974E-6 : f32
    %21 = vector.broadcast %cst_11 : f32 to vector<16x1xf32>
    %22 = arith.addf %18, %21 : vector<16x1xf32>
    %23 = math.rsqrt %22 : vector<16x1xf32>
    %24 = vector.broadcast %23 : vector<16x1xf32> to vector<16x32xf32>
    %25 = arith.mulf %20, %24 : vector<16x32xf32>
    %26 = vector.broadcast %6 : vector<1x32xf32> to vector<16x32xf32>
    %27 = arith.mulf %25, %26 : vector<16x32xf32>
    %28 = vector.broadcast %7 : vector<1x32xf32> to vector<16x32xf32>
    %29 = arith.addf %27, %28 : vector<16x32xf32>
    %c0_12 = arith.constant 0 : index
    %c0_13 = arith.constant 0 : index
    %30 = vector.load %arg3[%c0_12, %c0_13] : memref<16x16xf32, #tpu.memory_space<vmem>>, vector<16x16xf32>
    %c0_14 = arith.constant 0 : index
    %c0_15 = arith.constant 0 : index
    %31 = vector.load %arg2[%c0_14, %c0_15] : memref<1x16xf32, #tpu.memory_space<vmem>>, vector<1x16xf32>
    %32 = vector.broadcast %31 : vector<1x16xf32> to vector<16x16xf32>
    %33 = arith.addf %30, %32 : vector<16x16xf32>
    %c0_16 = arith.constant 0 : index
    %c0_17 = arith.constant 0 : index
    %c0_18 = arith.constant 0 : index
    %34 = vector.load %arg6[%c0_16, %c0_17, %c0_18] : memref<2x32x384xf32, #tpu.memory_space<vmem>>, vector<1x32x384xf32>
    %35 = vector.shape_cast %34 : vector<1x32x384xf32> to vector<32x384xf32>
    %cst_19 = arith.constant dense<0.000000e+00> : vector<16x384xf32>
    %36 = tpu.matmul %29, %35, %cst_19 {dimension_numbers = #tpu.dot_dimension_numbers<[1], [0], [0], [1], [0, 0, 1, 1], [], []>} : vector<16x32xf32>, vector<32x384xf32>, vector<16x384xf32> -> vector<16x384xf32>
    %c0_20 = arith.constant 0 : index
    %c0_21 = arith.constant 0 : index
    %c0_22 = arith.constant 0 : index
    %37 = vector.load %arg7[%c0_20, %c0_21, %c0_22] : memref<2x1x384xf32, #tpu.memory_space<vmem>>, vector<1x1x384xf32>
    %38 = vector.shape_cast %37 : vector<1x1x384xf32> to vector<1x384xf32>
    %39 = vector.broadcast %38 : vector<1x384xf32> to vector<16x384xf32>
    %40 = arith.addf %36, %39 : vector<16x384xf32>
    %41 = vector.extract_strided_slice %40 {offsets = [0, 0], sizes = [16, 128], strides = [1, 1]} : vector<16x384xf32> to vector<16x128xf32>
    %42 = vector.extract_strided_slice %40 {offsets = [0, 128], sizes = [16, 128], strides = [1, 1]} : vector<16x384xf32> to vector<16x128xf32>
    %43 = vector.extract_strided_slice %40 {offsets = [0, 256], sizes = [16, 128], strides = [1, 1]} : vector<16x384xf32> to vector<16x128xf32>
    %cst_23 = arith.constant dense<0.000000e+00> : vector<16x16xf32>
    %44 = tpu.matmul %41, %42, %cst_23 {dimension_numbers = #tpu.dot_dimension_numbers<[1], [1], [0], [0], [0, 0, 1, 0], [], []>} : vector<16x128xf32>, vector<16x128xf32>, vector<16x16xf32> -> vector<16x16xf32>
    %45 = arith.addf %44, %33 : vector<16x16xf32>
    %46 = math.exp %45 : vector<16x16xf32>
    %cst_24 = arith.constant dense<0.000000e+00> : vector<16xf32>
    %47 = vector.multi_reduction <add>, %46, %cst_24 [1] : vector<16x16xf32> to vector<16xf32>
    %48 = vector.shape_cast %47 : vector<16xf32> to vector<16x1xf32>
    %49 = tpu.reciprocal %48 {approx = true} : vector<16x1xf32> -> vector<16x1xf32>
    %50 = vector.broadcast %49 : vector<16x1xf32> to vector<16x16xf32>
    %51 = arith.mulf %46, %50 : vector<16x16xf32>
    %cst_25 = arith.constant dense<0.000000e+00> : vector<16x128xf32>
    %52 = tpu.matmul %51, %43, %cst_25 {dimension_numbers = #tpu.dot_dimension_numbers<[1], [0], [0], [1], [0, 0, 1, 1], [], []>} : vector<16x16xf32>, vector<16x128xf32>, vector<16x128xf32> -> vector<16x128xf32>
    %c0_26 = arith.constant 0 : index
    %c0_27 = arith.constant 0 : index
    %c0_28 = arith.constant 0 : index
    %53 = vector.load %arg8[%c0_26, %c0_27, %c0_28] : memref<2x128x32xf32, #tpu.memory_space<vmem>>, vector<1x128x32xf32>
    %54 = vector.shape_cast %53 : vector<1x128x32xf32> to vector<128x32xf32>
    %cst_29 = arith.constant dense<0.000000e+00> : vector<16x32xf32>
    %55 = tpu.matmul %52, %54, %cst_29 {dimension_numbers = #tpu.dot_dimension_numbers<[1], [0], [0], [1], [0, 0, 1, 1], [], []>} : vector<16x128xf32>, vector<128x32xf32>, vector<16x32xf32> -> vector<16x32xf32>
    %c0_30 = arith.constant 0 : index
    %c0_31 = arith.constant 0 : index
    %c0_32 = arith.constant 0 : index
    %56 = vector.load %arg9[%c0_30, %c0_31, %c0_32] : memref<2x1x32xf32, #tpu.memory_space<vmem>>, vector<1x1x32xf32>
    %57 = vector.shape_cast %56 : vector<1x1x32xf32> to vector<1x32xf32>
    %58 = vector.broadcast %57 : vector<1x32xf32> to vector<16x32xf32>
    %59 = arith.addf %55, %58 : vector<16x32xf32>
    %60 = arith.addf %29, %59 : vector<16x32xf32>
    %c0_33 = arith.constant 0 : index
    %c0_34 = arith.constant 0 : index
    %c0_35 = arith.constant 0 : index
    %61 = vector.load %arg10[%c0_33, %c0_34, %c0_35] : memref<2x1x32xf32, #tpu.memory_space<vmem>>, vector<1x1x32xf32>
    %62 = vector.shape_cast %61 : vector<1x1x32xf32> to vector<1x32xf32>
    %c0_36 = arith.constant 0 : index
    %c0_37 = arith.constant 0 : index
    %c0_38 = arith.constant 0 : index
    %63 = vector.load %arg11[%c0_36, %c0_37, %c0_38] : memref<2x1x32xf32, #tpu.memory_space<vmem>>, vector<1x1x32xf32>
    %64 = vector.shape_cast %63 : vector<1x1x32xf32> to vector<1x32xf32>
    %cst_39 = arith.constant dense<0.000000e+00> : vector<16xf32>
    %65 = vector.multi_reduction <add>, %60, %cst_39 [1] : vector<16x32xf32> to vector<16xf32>
    %66 = vector.shape_cast %65 : vector<16xf32> to vector<16x1xf32>
    %67 = arith.mulf %60, %60 : vector<16x32xf32>
    %cst_40 = arith.constant dense<0.000000e+00> : vector<16xf32>
    %68 = vector.multi_reduction <add>, %67, %cst_40 [1] : vector<16x32xf32> to vector<16xf32>
    %69 = vector.shape_cast %68 : vector<16xf32> to vector<16x1xf32>
    %cst_41 = arith.constant 3.125000e-02 : f32
    %70 = vector.broadcast %cst_41 : f32 to vector<16x1xf32>
    %71 = arith.mulf %66, %70 : vector<16x1xf32>
    %cst_42 = arith.constant 3.125000e-02 : f32
    %72 = vector.broadcast %cst_42 : f32 to vector<16x1xf32>
    %73 = arith.mulf %69, %72 : vector<16x1xf32>
    %74 = arith.mulf %71, %71 : vector<16x1xf32>
    %75 = arith.subf %73, %74 : vector<16x1xf32>
    %76 = vector.broadcast %71 : vector<16x1xf32> to vector<16x32xf32>
    %77 = arith.subf %60, %76 : vector<16x32xf32>
    %cst_43 = arith.constant 9.99999974E-6 : f32
    %78 = vector.broadcast %cst_43 : f32 to vector<16x1xf32>
    %79 = arith.addf %75, %78 : vector<16x1xf32>
    %80 = math.rsqrt %79 : vector<16x1xf32>
    %81 = vector.broadcast %80 : vector<16x1xf32> to vector<16x32xf32>
    %82 = arith.mulf %77, %81 : vector<16x32xf32>
    %83 = vector.broadcast %62 : vector<1x32xf32> to vector<16x32xf32>
    %84 = arith.mulf %82, %83 : vector<16x32xf32>
    %85 = vector.broadcast %64 : vector<1x32xf32> to vector<16x32xf32>
    %86 = arith.addf %84, %85 : vector<16x32xf32>
    %c0_44 = arith.constant 0 : index
    %c0_45 = arith.constant 0 : index
    %c0_46 = arith.constant 0 : index
    %87 = vector.load %arg12[%c0_44, %c0_45, %c0_46] : memref<2x32x64xf32, #tpu.memory_space<vmem>>, vector<1x32x64xf32>
    %88 = vector.shape_cast %87 : vector<1x32x64xf32> to vector<32x64xf32>
    %cst_47 = arith.constant dense<0.000000e+00> : vector<16x64xf32>
    %89 = tpu.matmul %86, %88, %cst_47 {dimension_numbers = #tpu.dot_dimension_numbers<[1], [0], [0], [1], [0, 0, 1, 1], [], []>} : vector<16x32xf32>, vector<32x64xf32>, vector<16x64xf32> -> vector<16x64xf32>
    %c0_48 = arith.constant 0 : index
    %c0_49 = arith.constant 0 : index
    %c0_50 = arith.constant 0 : index
    %90 = vector.load %arg13[%c0_48, %c0_49, %c0_50] : memref<2x1x64xf32, #tpu.memory_space<vmem>>, vector<1x1x64xf32>
    %91 = vector.shape_cast %90 : vector<1x1x64xf32> to vector<1x64xf32>
    %92 = vector.broadcast %91 : vector<1x64xf32> to vector<16x64xf32>
    %93 = arith.addf %89, %92 : vector<16x64xf32>
    %94 = arith.mulf %93, %93 : vector<16x64xf32>
    %95 = arith.mulf %93, %94 : vector<16x64xf32>
    %cst_51 = arith.constant 4.471500e-02 : f32
    %96 = vector.broadcast %cst_51 : f32 to vector<16x64xf32>
    %97 = arith.mulf %96, %95 : vector<16x64xf32>
    %98 = arith.addf %93, %97 : vector<16x64xf32>
    %cst_52 = arith.constant 0.797884583 : f32
    %99 = vector.broadcast %cst_52 : f32 to vector<16x64xf32>
    %100 = arith.mulf %99, %98 : vector<16x64xf32>
    %101 = math.tanh %100 : vector<16x64xf32>
    %cst_53 = arith.constant 1.000000e+00 : f32
    %102 = vector.broadcast %cst_53 : f32 to vector<16x64xf32>
    %103 = arith.addf %102, %101 : vector<16x64xf32>
    %cst_54 = arith.constant 5.000000e-01 : f32
    %104 = vector.broadcast %cst_54 : f32 to vector<16x64xf32>
    %105 = arith.mulf %104, %103 : vector<16x64xf32>
    %106 = arith.mulf %93, %105 : vector<16x64xf32>
    %c0_55 = arith.constant 0 : index
    %c0_56 = arith.constant 0 : index
    %c0_57 = arith.constant 0 : index
    %107 = vector.load %arg14[%c0_55, %c0_56, %c0_57] : memref<2x64x32xf32, #tpu.memory_space<vmem>>, vector<1x64x32xf32>
    %108 = vector.shape_cast %107 : vector<1x64x32xf32> to vector<64x32xf32>
    %cst_58 = arith.constant dense<0.000000e+00> : vector<16x32xf32>
    %109 = tpu.matmul %106, %108, %cst_58 {dimension_numbers = #tpu.dot_dimension_numbers<[1], [0], [0], [1], [0, 0, 1, 1], [], []>} : vector<16x64xf32>, vector<64x32xf32>, vector<16x32xf32> -> vector<16x32xf32>
    %c0_59 = arith.constant 0 : index
    %c0_60 = arith.constant 0 : index
    %c0_61 = arith.constant 0 : index
    %110 = vector.load %arg15[%c0_59, %c0_60, %c0_61] : memref<2x1x32xf32, #tpu.memory_space<vmem>>, vector<1x1x32xf32>
    %111 = vector.shape_cast %110 : vector<1x1x32xf32> to vector<1x32xf32>
    %112 = vector.broadcast %111 : vector<1x32xf32> to vector<16x32xf32>
    %113 = arith.addf %109, %112 : vector<16x32xf32>
    %114 = arith.addf %86, %113 : vector<16x32xf32>
    %c0_62 = arith.constant 0 : index
    %c0_63 = arith.constant 0 : index
    %c0_64 = arith.constant 0 : index
    %115 = vector.load %arg16[%c0_62, %c0_63, %c0_64] : memref<2x1x32xf32, #tpu.memory_space<vmem>>, vector<1x1x32xf32>
    %116 = vector.shape_cast %115 : vector<1x1x32xf32> to vector<1x32xf32>
    %c0_65 = arith.constant 0 : index
    %c0_66 = arith.constant 0 : index
    %c0_67 = arith.constant 0 : index
    %117 = vector.load %arg17[%c0_65, %c0_66, %c0_67] : memref<2x1x32xf32, #tpu.memory_space<vmem>>, vector<1x1x32xf32>
    %118 = vector.shape_cast %117 : vector<1x1x32xf32> to vector<1x32xf32>
    %cst_68 = arith.constant dense<0.000000e+00> : vector<16xf32>
    %119 = vector.multi_reduction <add>, %114, %cst_68 [1] : vector<16x32xf32> to vector<16xf32>
    %120 = vector.shape_cast %119 : vector<16xf32> to vector<16x1xf32>
    %121 = arith.mulf %114, %114 : vector<16x32xf32>
    %cst_69 = arith.constant dense<0.000000e+00> : vector<16xf32>
    %122 = vector.multi_reduction <add>, %121, %cst_69 [1] : vector<16x32xf32> to vector<16xf32>
    %123 = vector.shape_cast %122 : vector<16xf32> to vector<16x1xf32>
    %cst_70 = arith.constant 3.125000e-02 : f32
    %124 = vector.broadcast %cst_70 : f32 to vector<16x1xf32>
    %125 = arith.mulf %120, %124 : vector<16x1xf32>
    %cst_71 = arith.constant 3.125000e-02 : f32
    %126 = vector.broadcast %cst_71 : f32 to vector<16x1xf32>
    %127 = arith.mulf %123, %126 : vector<16x1xf32>
    %128 = arith.mulf %125, %125 : vector<16x1xf32>
    %129 = arith.subf %127, %128 : vector<16x1xf32>
    %130 = vector.broadcast %125 : vector<16x1xf32> to vector<16x32xf32>
    %131 = arith.subf %114, %130 : vector<16x32xf32>
    %cst_72 = arith.constant 9.99999974E-6 : f32
    %132 = vector.broadcast %cst_72 : f32 to vector<16x1xf32>
    %133 = arith.addf %129, %132 : vector<16x1xf32>
    %134 = math.rsqrt %133 : vector<16x1xf32>
    %135 = vector.broadcast %134 : vector<16x1xf32> to vector<16x32xf32>
    %136 = arith.mulf %131, %135 : vector<16x32xf32>
    %137 = vector.broadcast %116 : vector<1x32xf32> to vector<16x32xf32>
    %138 = arith.mulf %136, %137 : vector<16x32xf32>
    %139 = vector.broadcast %118 : vector<1x32xf32> to vector<16x32xf32>
    %140 = arith.addf %138, %139 : vector<16x32xf32>
    %c1 = arith.constant 1 : index
    %c0_73 = arith.constant 0 : index
    %c0_74 = arith.constant 0 : index
    %141 = vector.load %arg6[%c1, %c0_73, %c0_74] : memref<2x32x384xf32, #tpu.memory_space<vmem>>, vector<1x32x384xf32>
    %142 = vector.shape_cast %141 : vector<1x32x384xf32> to vector<32x384xf32>
    %cst_75 = arith.constant dense<0.000000e+00> : vector<16x384xf32>
    %143 = tpu.matmul %140, %142, %cst_75 {dimension_numbers = #tpu.dot_dimension_numbers<[1], [0], [0], [1], [0, 0, 1, 1], [], []>} : vector<16x32xf32>, vector<32x384xf32>, vector<16x384xf32> -> vector<16x384xf32>
    %c1_76 = arith.constant 1 : index
    %c0_77 = arith.constant 0 : index
    %c0_78 = arith.constant 0 : index
    %144 = vector.load %arg7[%c1_76, %c0_77, %c0_78] : memref<2x1x384xf32, #tpu.memory_space<vmem>>, vector<1x1x384xf32>
    %145 = vector.shape_cast %144 : vector<1x1x384xf32> to vector<1x384xf32>
    %146 = vector.broadcast %145 : vector<1x384xf32> to vector<16x384xf32>
    %147 = arith.addf %143, %146 : vector<16x384xf32>
    %148 = vector.extract_strided_slice %147 {offsets = [0, 0], sizes = [16, 128], strides = [1, 1]} : vector<16x384xf32> to vector<16x128xf32>
    %149 = vector.extract_strided_slice %147 {offsets = [0, 128], sizes = [16, 128], strides = [1, 1]} : vector<16x384xf32> to vector<16x128xf32>
    %150 = vector.extract_strided_slice %147 {offsets = [0, 256], sizes = [16, 128], strides = [1, 1]} : vector<16x384xf32> to vector<16x128xf32>
    %cst_79 = arith.constant dense<0.000000e+00> : vector<16x16xf32>
    %151 = tpu.matmul %148, %149, %cst_79 {dimension_numbers = #tpu.dot_dimension_numbers<[1], [1], [0], [0], [0, 0, 1, 0], [], []>} : vector<16x128xf32>, vector<16x128xf32>, vector<16x16xf32> -> vector<16x16xf32>
    %152 = arith.addf %151, %33 : vector<16x16xf32>
    %153 = math.exp %152 : vector<16x16xf32>
    %cst_80 = arith.constant dense<0.000000e+00> : vector<16xf32>
    %154 = vector.multi_reduction <add>, %153, %cst_80 [1] : vector<16x16xf32> to vector<16xf32>
    %155 = vector.shape_cast %154 : vector<16xf32> to vector<16x1xf32>
    %156 = tpu.reciprocal %155 {approx = true} : vector<16x1xf32> -> vector<16x1xf32>
    %157 = vector.broadcast %156 : vector<16x1xf32> to vector<16x16xf32>
    %158 = arith.mulf %153, %157 : vector<16x16xf32>
    %cst_81 = arith.constant dense<0.000000e+00> : vector<16x128xf32>
    %159 = tpu.matmul %158, %150, %cst_81 {dimension_numbers = #tpu.dot_dimension_numbers<[1], [0], [0], [1], [0, 0, 1, 1], [], []>} : vector<16x16xf32>, vector<16x128xf32>, vector<16x128xf32> -> vector<16x128xf32>
    %c1_82 = arith.constant 1 : index
    %c0_83 = arith.constant 0 : index
    %c0_84 = arith.constant 0 : index
    %160 = vector.load %arg8[%c1_82, %c0_83, %c0_84] : memref<2x128x32xf32, #tpu.memory_space<vmem>>, vector<1x128x32xf32>
    %161 = vector.shape_cast %160 : vector<1x128x32xf32> to vector<128x32xf32>
    %cst_85 = arith.constant dense<0.000000e+00> : vector<16x32xf32>
    %162 = tpu.matmul %159, %161, %cst_85 {dimension_numbers = #tpu.dot_dimension_numbers<[1], [0], [0], [1], [0, 0, 1, 1], [], []>} : vector<16x128xf32>, vector<128x32xf32>, vector<16x32xf32> -> vector<16x32xf32>
    %c1_86 = arith.constant 1 : index
    %c0_87 = arith.constant 0 : index
    %c0_88 = arith.constant 0 : index
    %163 = vector.load %arg9[%c1_86, %c0_87, %c0_88] : memref<2x1x32xf32, #tpu.memory_space<vmem>>, vector<1x1x32xf32>
    %164 = vector.shape_cast %163 : vector<1x1x32xf32> to vector<1x32xf32>
    %165 = vector.broadcast %164 : vector<1x32xf32> to vector<16x32xf32>
    %166 = arith.addf %162, %165 : vector<16x32xf32>
    %167 = arith.addf %140, %166 : vector<16x32xf32>
    %c1_89 = arith.constant 1 : index
    %c0_90 = arith.constant 0 : index
    %c0_91 = arith.constant 0 : index
    %168 = vector.load %arg10[%c1_89, %c0_90, %c0_91] : memref<2x1x32xf32, #tpu.memory_space<vmem>>, vector<1x1x32xf32>
    %169 = vector.shape_cast %168 : vector<1x1x32xf32> to vector<1x32xf32>
    %c1_92 = arith.constant 1 : index
    %c0_93 = arith.constant 0 : index
    %c0_94 = arith.constant 0 : index
    %170 = vector.load %arg11[%c1_92, %c0_93, %c0_94] : memref<2x1x32xf32, #tpu.memory_space<vmem>>, vector<1x1x32xf32>
    %171 = vector.shape_cast %170 : vector<1x1x32xf32> to vector<1x32xf32>
    %cst_95 = arith.constant dense<0.000000e+00> : vector<16xf32>
    %172 = vector.multi_reduction <add>, %167, %cst_95 [1] : vector<16x32xf32> to vector<16xf32>
    %173 = vector.shape_cast %172 : vector<16xf32> to vector<16x1xf32>
    %174 = arith.mulf %167, %167 : vector<16x32xf32>
    %cst_96 = arith.constant dense<0.000000e+00> : vector<16xf32>
    %175 = vector.multi_reduction <add>, %174, %cst_96 [1] : vector<16x32xf32> to vector<16xf32>
    %176 = vector.shape_cast %175 : vector<16xf32> to vector<16x1xf32>
    %cst_97 = arith.constant 3.125000e-02 : f32
    %177 = vector.broadcast %cst_97 : f32 to vector<16x1xf32>
    %178 = arith.mulf %173, %177 : vector<16x1xf32>
    %cst_98 = arith.constant 3.125000e-02 : f32
    %179 = vector.broadcast %cst_98 : f32 to vector<16x1xf32>
    %180 = arith.mulf %176, %179 : vector<16x1xf32>
    %181 = arith.mulf %178, %178 : vector<16x1xf32>
    %182 = arith.subf %180, %181 : vector<16x1xf32>
    %183 = vector.broadcast %178 : vector<16x1xf32> to vector<16x32xf32>
    %184 = arith.subf %167, %183 : vector<16x32xf32>
    %cst_99 = arith.constant 9.99999974E-6 : f32
    %185 = vector.broadcast %cst_99 : f32 to vector<16x1xf32>
    %186 = arith.addf %182, %185 : vector<16x1xf32>
    %187 = math.rsqrt %186 : vector<16x1xf32>
    %188 = vector.broadcast %187 : vector<16x1xf32> to vector<16x32xf32>
    %189 = arith.mulf %184, %188 : vector<16x32xf32>
    %190 = vector.broadcast %169 : vector<1x32xf32> to vector<16x32xf32>
    %191 = arith.mulf %189, %190 : vector<16x32xf32>
    %192 = vector.broadcast %171 : vector<1x32xf32> to vector<16x32xf32>
    %193 = arith.addf %191, %192 : vector<16x32xf32>
    %c1_100 = arith.constant 1 : index
    %c0_101 = arith.constant 0 : index
    %c0_102 = arith.constant 0 : index
    %194 = vector.load %arg12[%c1_100, %c0_101, %c0_102] : memref<2x32x64xf32, #tpu.memory_space<vmem>>, vector<1x32x64xf32>
    %195 = vector.shape_cast %194 : vector<1x32x64xf32> to vector<32x64xf32>
    %cst_103 = arith.constant dense<0.000000e+00> : vector<16x64xf32>
    %196 = tpu.matmul %193, %195, %cst_103 {dimension_numbers = #tpu.dot_dimension_numbers<[1], [0], [0], [1], [0, 0, 1, 1], [], []>} : vector<16x32xf32>, vector<32x64xf32>, vector<16x64xf32> -> vector<16x64xf32>
    %c1_104 = arith.constant 1 : index
    %c0_105 = arith.constant 0 : index
    %c0_106 = arith.constant 0 : index
    %197 = vector.load %arg13[%c1_104, %c0_105, %c0_106] : memref<2x1x64xf32, #tpu.memory_space<vmem>>, vector<1x1x64xf32>
    %198 = vector.shape_cast %197 : vector<1x1x64xf32> to vector<1x64xf32>
    %199 = vector.broadcast %198 : vector<1x64xf32> to vector<16x64xf32>
    %200 = arith.addf %196, %199 : vector<16x64xf32>
    %201 = arith.mulf %200, %200 : vector<16x64xf32>
    %202 = arith.mulf %200, %201 : vector<16x64xf32>
    %cst_107 = arith.constant 4.471500e-02 : f32
    %203 = vector.broadcast %cst_107 : f32 to vector<16x64xf32>
    %204 = arith.mulf %203, %202 : vector<16x64xf32>
    %205 = arith.addf %200, %204 : vector<16x64xf32>
    %cst_108 = arith.constant 0.797884583 : f32
    %206 = vector.broadcast %cst_108 : f32 to vector<16x64xf32>
    %207 = arith.mulf %206, %205 : vector<16x64xf32>
    %208 = math.tanh %207 : vector<16x64xf32>
    %cst_109 = arith.constant 1.000000e+00 : f32
    %209 = vector.broadcast %cst_109 : f32 to vector<16x64xf32>
    %210 = arith.addf %209, %208 : vector<16x64xf32>
    %cst_110 = arith.constant 5.000000e-01 : f32
    %211 = vector.broadcast %cst_110 : f32 to vector<16x64xf32>
    %212 = arith.mulf %211, %210 : vector<16x64xf32>
    %213 = arith.mulf %200, %212 : vector<16x64xf32>
    %c1_111 = arith.constant 1 : index
    %c0_112 = arith.constant 0 : index
    %c0_113 = arith.constant 0 : index
    %214 = vector.load %arg14[%c1_111, %c0_112, %c0_113] : memref<2x64x32xf32, #tpu.memory_space<vmem>>, vector<1x64x32xf32>
    %215 = vector.shape_cast %214 : vector<1x64x32xf32> to vector<64x32xf32>
    %cst_114 = arith.constant dense<0.000000e+00> : vector<16x32xf32>
    %216 = tpu.matmul %213, %215, %cst_114 {dimension_numbers = #tpu.dot_dimension_numbers<[1], [0], [0], [1], [0, 0, 1, 1], [], []>} : vector<16x64xf32>, vector<64x32xf32>, vector<16x32xf32> -> vector<16x32xf32>
    %c1_115 = arith.constant 1 : index
    %c0_116 = arith.constant 0 : index
    %c0_117 = arith.constant 0 : index
    %217 = vector.load %arg15[%c1_115, %c0_116, %c0_117] : memref<2x1x32xf32, #tpu.memory_space<vmem>>, vector<1x1x32xf32>
    %218 = vector.shape_cast %217 : vector<1x1x32xf32> to vector<1x32xf32>
    %219 = vector.broadcast %218 : vector<1x32xf32> to vector<16x32xf32>
    %220 = arith.addf %216, %219 : vector<16x32xf32>
    %221 = arith.addf %193, %220 : vector<16x32xf32>
    %c1_118 = arith.constant 1 : index
    %c0_119 = arith.constant 0 : index
    %c0_120 = arith.constant 0 : index
    %222 = vector.load %arg16[%c1_118, %c0_119, %c0_120] : memref<2x1x32xf32, #tpu.memory_space<vmem>>, vector<1x1x32xf32>
    %223 = vector.shape_cast %222 : vector<1x1x32xf32> to vector<1x32xf32>
    %c1_121 = arith.constant 1 : index
    %c0_122 = arith.constant 0 : index
    %c0_123 = arith.constant 0 : index
    %224 = vector.load %arg17[%c1_121, %c0_122, %c0_123] : memref<2x1x32xf32, #tpu.memory_space<vmem>>, vector<1x1x32xf32>
    %225 = vector.shape_cast %224 : vector<1x1x32xf32> to vector<1x32xf32>
    %cst_124 = arith.constant dense<0.000000e+00> : vector<16xf32>
    %226 = vector.multi_reduction <add>, %221, %cst_124 [1] : vector<16x32xf32> to vector<16xf32>
    %227 = vector.shape_cast %226 : vector<16xf32> to vector<16x1xf32>
    %228 = arith.mulf %221, %221 : vector<16x32xf32>
    %cst_125 = arith.constant dense<0.000000e+00> : vector<16xf32>
    %229 = vector.multi_reduction <add>, %228, %cst_125 [1] : vector<16x32xf32> to vector<16xf32>
    %230 = vector.shape_cast %229 : vector<16xf32> to vector<16x1xf32>
    %cst_126 = arith.constant 3.125000e-02 : f32
    %231 = vector.broadcast %cst_126 : f32 to vector<16x1xf32>
    %232 = arith.mulf %227, %231 : vector<16x1xf32>
    %cst_127 = arith.constant 3.125000e-02 : f32
    %233 = vector.broadcast %cst_127 : f32 to vector<16x1xf32>
    %234 = arith.mulf %230, %233 : vector<16x1xf32>
    %235 = arith.mulf %232, %232 : vector<16x1xf32>
    %236 = arith.subf %234, %235 : vector<16x1xf32>
    %237 = vector.broadcast %232 : vector<16x1xf32> to vector<16x32xf32>
    %238 = arith.subf %221, %237 : vector<16x32xf32>
    %cst_128 = arith.constant 9.99999974E-6 : f32
    %239 = vector.broadcast %cst_128 : f32 to vector<16x1xf32>
    %240 = arith.addf %236, %239 : vector<16x1xf32>
    %241 = math.rsqrt %240 : vector<16x1xf32>
    %242 = vector.broadcast %241 : vector<16x1xf32> to vector<16x32xf32>
    %243 = arith.mulf %238, %242 : vector<16x32xf32>
    %244 = vector.broadcast %223 : vector<1x32xf32> to vector<16x32xf32>
    %245 = arith.mulf %243, %244 : vector<16x32xf32>
    %246 = vector.broadcast %225 : vector<1x32xf32> to vector<16x32xf32>
    %247 = arith.addf %245, %246 : vector<16x32xf32>
    %248 = vector.shape_cast %247 : vector<16x32xf32> to vector<2x8x32xf32>
    %249 = vector.extract_strided_slice %248 {offsets = [0, 0, 0], sizes = [2, 1, 32], strides = [1, 1, 1]} : vector<2x8x32xf32> to vector<2x1x32xf32>
    %250 = vector.shape_cast %249 : vector<2x1x32xf32> to vector<2x32xf32>
    %c0_129 = arith.constant 0 : index
    %c0_130 = arith.constant 0 : index
    %251 = vector.load %arg18[%c0_129, %c0_130] : memref<32x32xf32, #tpu.memory_space<vmem>>, vector<32x32xf32>
    %cst_131 = arith.constant dense<0.000000e+00> : vector<2x32xf32>
    %252 = tpu.matmul %250, %251, %cst_131 {dimension_numbers = #tpu.dot_dimension_numbers<[1], [0], [0], [1], [0, 0, 1, 1], [], []>} : vector<2x32xf32>, vector<32x32xf32>, vector<2x32xf32> -> vector<2x32xf32>
    %c0_132 = arith.constant 0 : index
    %c0_133 = arith.constant 0 : index
    %253 = vector.load %arg19[%c0_132, %c0_133] : memref<1x32xf32, #tpu.memory_space<vmem>>, vector<1x32xf32>
    %254 = vector.broadcast %253 : vector<1x32xf32> to vector<2x32xf32>
    %255 = arith.addf %252, %254 : vector<2x32xf32>
    %256 = math.tanh %255 : vector<2x32xf32>
    %c0_134 = arith.constant 0 : index
    %c0_135 = arith.constant 0 : index
    %257 = vector.load %arg20[%c0_134, %c0_135] : memref<32x128xf32, #tpu.memory_space<vmem>>, vector<32x128xf32>
    %cst_136 = arith.constant dense<0.000000e+00> : vector<2x128xf32>
    %258 = tpu.matmul %256, %257, %cst_136 {dimension_numbers = #tpu.dot_dimension_numbers<[1], [0], [0], [1], [0, 0, 1, 1], [], []>} : vector<2x32xf32>, vector<32x128xf32>, vector<2x128xf32> -> vector<2x128xf32>
    %c0_137 = arith.constant 0 : index
    %c0_138 = arith.constant 0 : index
    %259 = vector.load %arg21[%c0_137, %c0_138] : memref<1x128xf32, #tpu.memory_space<vmem>>, vector<1x128xf32>
    %260 = vector.broadcast %259 : vector<1x128xf32> to vector<2x128xf32>
    %261 = arith.addf %258, %260 : vector<2x128xf32>
    %c0_139 = arith.constant 0 : index
    %c0_140 = arith.constant 0 : index
    %262 = vector.load %arg22[%c0_139, %c0_140] : memref<2x128xf32, #tpu.memory_space<vmem>>, vector<2x128xf32>
    tpu.vector_store %arg22[%c0_139, %c0_140], %261 {strides = array<i32>} : memref<2x128xf32, #tpu.memory_space<vmem>>, vector<2x128xf32>,
    return
  }
}

</mosaic_0001>

<llo_original>
// kernel: tpu_custom_call.1
$region0: #{tpu_custom_call.1}
  #allocation0 [shape = 'u32[]', space=smem, size = 0x4, offset = 0x4, fixed_abs, tag = 'smem constant byte address 0x4 - core index']
  #allocation1 [shape = 'u32[144,128]{1,0:T(1,128)}', space=vmem, size = 0x12000, scoped, tag = 'internal scratch']
  %s0 = inlined_call_operand.vmem [shape: f32[2,8,32], index: 0, kind: input, shape index: {}]
  %s1 = inlined_call_operand.vmem [shape: f32[8,32], index: 1, kind: input, shape index: {}]
  %s2 = inlined_call_operand.vmem [shape: f32[1,16], index: 2, kind: input, shape index: {}]
  %s3 = inlined_call_operand.vmem [shape: f32[16,16], index: 3, kind: input, shape index: {}]
  %s4 = inlined_call_operand.vmem [shape: f32[1,32], index: 4, kind: input, shape index: {}]
  %s5 = inlined_call_operand.vmem [shape: f32[1,32], index: 5, kind: input, shape index: {}]
  %s6 = inlined_call_operand.vmem [shape: f32[2,32,384], index: 6, kind: input, shape index: {}]
  %s7 = inlined_call_operand.vmem [shape: f32[2,1,384], index: 7, kind: input, shape index: {}]
  %s8 = inlined_call_operand.vmem [shape: f32[2,128,32], index: 8, kind: input, shape index: {}]
  %s9 = inlined_call_operand.vmem [shape: f32[2,1,32], index: 9, kind: input, shape index: {}]
  %s10 = inlined_call_operand.vmem [shape: f32[2,1,32], index: 10, kind: input, shape index: {}]
  %s11 = inlined_call_operand.vmem [shape: f32[2,1,32], index: 11, kind: input, shape index: {}]
  %s12 = inlined_call_operand.vmem [shape: f32[2,32,64], index: 12, kind: input, shape index: {}]
  %s13 = inlined_call_operand.vmem [shape: f32[2,1,64], index: 13, kind: input, shape index: {}]
  %s14 = inlined_call_operand.vmem [shape: f32[2,64,32], index: 14, kind: input, shape index: {}]
  %s15 = inlined_call_operand.vmem [shape: f32[2,1,32], index: 15, kind: input, shape index: {}]
  %s16 = inlined_call_operand.vmem [shape: f32[2,1,32], index: 16, kind: input, shape index: {}]
  %s17 = inlined_call_operand.vmem [shape: f32[2,1,32], index: 17, kind: input, shape index: {}]
  %s18 = inlined_call_operand.vmem [shape: f32[32,32], index: 18, kind: input, shape index: {}]
  %s19 = inlined_call_operand.vmem [shape: f32[1,32], index: 19, kind: input, shape index: {}]
  %s20 = inlined_call_operand.vmem [shape: f32[32,128], index: 20, kind: input, shape index: {}]
  %s21 = inlined_call_operand.vmem [shape: f32[1,128], index: 21, kind: input, shape index: {}]
  %s22 = inlined_call_operand.hbm [shape: f32[2,128], index: 22, kind: output, shape index: {}]
  %s23 = sld [smem:[#allocation0]]
  $region98: #{tpu_custom_call.1} parent=0
    _
  %s25 = ssub.s32 1, %s23
  %s26 = scalar_select 0, %s25, %s23
  $region1: #{tpu_custom_call.1} parent=0
    #allocation2 [shape = 'u8[1024]{0}', space=vmem, size = 0x400, scoped, tag = 'output window, operand 0, single buffered']
    #allocation3 [shape = 's32[1]{0}', space=sflag, size = 0x4, scoped, tag = 'scoped memory for tpu_custom_call.1']
    %27 = vsyncpa [#allocation3], 0
    // Predicated region
    $region2: #{tpu_custom_call.1} parent=1 // pred_check
      _
    $region3: #{tpu_custom_call.1} parent=1 // pred_check_branch
      %29 = sbr.rel (0) target = $region5
    $region4: #{tpu_custom_call.1} parent=1 // pred_region
      _
    $region5: #{tpu_custom_call.1} parent=1 // pred_fallthru
      _
    // Predicated region
    $region6: #{tpu_custom_call.1} parent=1 // pred_check
      _
    $region7: #{tpu_custom_call.1} parent=1 // pred_check_branch
      %31 = sbr.rel (0) target = $region9
    $region8: #{tpu_custom_call.1} parent=1 // pred_region
      _
    $region9: #{tpu_custom_call.1} parent=1 // pred_fallthru
      _
    // Predicated region
    $region10: #{tpu_custom_call.1} parent=1 // pred_check
      _
    $region11: #{tpu_custom_call.1} parent=1 // pred_check_branch
      %33 = sbr.rel (0) target = $region13
    $region12: #{tpu_custom_call.1} parent=1 // pred_region
      _
    $region13: #{tpu_custom_call.1} parent=1 // pred_fallthru
      _
    // Predicated region
    $region14: #{tpu_custom_call.1} parent=1 // pred_check
      _
    $region15: #{tpu_custom_call.1} parent=1 // pred_check_branch
      %35 = sbr.rel (0) target = $region17
    $region16: #{tpu_custom_call.1} parent=1 // pred_region
      _
    $region17: #{tpu_custom_call.1} parent=1 // pred_fallthru
      _
    // Predicated region
    $region18: #{tpu_custom_call.1} parent=1 // pred_check
      _
    $region19: #{tpu_custom_call.1} parent=1 // pred_check_branch
      %37 = sbr.rel (0) target = $region21
    $region20: #{tpu_custom_call.1} parent=1 // pred_region
      _
    $region21: #{tpu_custom_call.1} parent=1 // pred_fallthru
      _
    // Predicated region
    $region22: #{tpu_custom_call.1} parent=1 // pred_check
      _
    $region23: #{tpu_custom_call.1} parent=1 // pred_check_branch
      %39 = sbr.rel (0) target = $region25
    $region24: #{tpu_custom_call.1} parent=1 // pred_region
      _
    $region25: #{tpu_custom_call.1} parent=1 // pred_fallthru
      _
    // Predicated region
    $region26: #{tpu_custom_call.1} parent=1 // pred_check
      _
    $region27: #{tpu_custom_call.1} parent=1 // pred_check_branch
      %41 = sbr.rel (0) target = $region29
    $region28: #{tpu_custom_call.1} parent=1 // pred_region
      _
    $region29: #{tpu_custom_call.1} parent=1 // pred_fallthru
      _
    // Predicated region
    $region30: #{tpu_custom_call.1} parent=1 // pred_check
      _
    $region31: #{tpu_custom_call.1} parent=1 // pred_check_branch
      %43 = sbr.rel (0) target = $region33
    $region32: #{tpu_custom_call.1} parent=1 // pred_region
      _
    $region33: #{tpu_custom_call.1} parent=1 // pred_fallthru
      _
    // Predicated region
    $region34: #{tpu_custom_call.1} parent=1 // pred_check
      _
    $region35: #{tpu_custom_call.1} parent=1 // pred_check_branch
      %45 = sbr.rel (0) target = $region37
    $region36: #{tpu_custom_call.1} parent=1 // pred_region
      _
    $region37: #{tpu_custom_call.1} parent=1 // pred_fallthru
      _
    // Predicated region
    $region38: #{tpu_custom_call.1} parent=1 // pred_check
      _
    $region39: #{tpu_custom_call.1} parent=1 // pred_check_branch
      %47 = sbr.rel (0) target = $region41
    $region40: #{tpu_custom_call.1} parent=1 // pred_region
      _
    $region41: #{tpu_custom_call.1} parent=1 // pred_fallthru
      _
    // Predicated region
    $region42: #{tpu_custom_call.1} parent=1 // pred_check
      _
    $region43: #{tpu_custom_call.1} parent=1 // pred_check_branch
      %49 = sbr.rel (0) target = $region45
    $region44: #{tpu_custom_call.1} parent=1 // pred_region
      _
    $region45: #{tpu_custom_call.1} parent=1 // pred_fallthru
      _
    // Predicated region
    $region46: #{tpu_custom_call.1} parent=1 // pred_check
      _
    $region47: #{tpu_custom_call.1} parent=1 // pred_check_branch
      %51 = sbr.rel (0) target = $region49
    $region48: #{tpu_custom_call.1} parent=1 // pred_region
      _
    $region49: #{tpu_custom_call.1} parent=1 // pred_fallthru
      _
    // Predicated region
    $region50: #{tpu_custom_call.1} parent=1 // pred_check
      _
    $region51: #{tpu_custom_call.1} parent=1 // pred_check_branch
      %53 = sbr.rel (0) target = $region53
    $region52: #{tpu_custom_call.1} parent=1 // pred_region
      _
    $region53: #{tpu_custom_call.1} parent=1 // pred_fallthru
      _
    // Predicated region
    $region54: #{tpu_custom_call.1} parent=1 // pred_check
      _
    $region55: #{tpu_custom_call.1} parent=1 // pred_check_branch
      %55 = sbr.rel (0) target = $region57
    $region56: #{tpu_custom_call.1} parent=1 // pred_region
      _
    $region57: #{tpu_custom_call.1} parent=1 // pred_fallthru
      _
    // Predicated region
    $region58: #{tpu_custom_call.1} parent=1 // pred_check
      _
    $region59: #{tpu_custom_call.1} parent=1 // pred_check_branch
      %57 = sbr.rel (0) target = $region61
    $region60: #{tpu_custom_call.1} parent=1 // pred_region
      _
    $region61: #{tpu_custom_call.1} parent=1 // pred_fallthru
      _
    // Predicated region
    $region62: #{tpu_custom_call.1} parent=1 // pred_check
      _
    $region63: #{tpu_custom_call.1} parent=1 // pred_check_branch
      %59 = sbr.rel (0) target = $region65
    $region64: #{tpu_custom_call.1} parent=1 // pred_region
      _
    $region65: #{tpu_custom_call.1} parent=1 // pred_fallthru
      _
    // Predicated region
    $region66: #{tpu_custom_call.1} parent=1 // pred_check
      _
    $region67: #{tpu_custom_call.1} parent=1 // pred_check_branch
      %61 = sbr.rel (0) target = $region69
    $region68: #{tpu_custom_call.1} parent=1 // pred_region
      _
    $region69: #{tpu_custom_call.1} parent=1 // pred_fallthru
      _
    // Predicated region
    $region70: #{tpu_custom_call.1} parent=1 // pred_check
      _
    $region71: #{tpu_custom_call.1} parent=1 // pred_check_branch
      %63 = sbr.rel (0) target = $region73
    $region72: #{tpu_custom_call.1} parent=1 // pred_region
      _
    $region73: #{tpu_custom_call.1} parent=1 // pred_fallthru
      _
    // Predicated region
    $region74: #{tpu_custom_call.1} parent=1 // pred_check
      _
    $region75: #{tpu_custom_call.1} parent=1 // pred_check_branch
      %65 = sbr.rel (0) target = $region77
    $region76: #{tpu_custom_call.1} parent=1 // pred_region
      _
    $region77: #{tpu_custom_call.1} parent=1 // pred_fallthru
      _
    // Predicated region
    $region78: #{tpu_custom_call.1} parent=1 // pred_check
      _
    $region79: #{tpu_custom_call.1} parent=1 // pred_check_branch
      %67 = sbr.rel (0) target = $region81
    $region80: #{tpu_custom_call.1} parent=1 // pred_region
      _
    $region81: #{tpu_custom_call.1} parent=1 // pred_fallthru
      _
    // Predicated region
    $region82: #{tpu_custom_call.1} parent=1 // pred_check
      _
    $region83: #{tpu_custom_call.1} parent=1 // pred_check_branch
      %69 = sbr.rel (0) target = $region85
    $region84: #{tpu_custom_call.1} parent=1 // pred_region
      _
    $region85: #{tpu_custom_call.1} parent=1 // pred_fallthru
      _
    // Predicated region
    $region86: #{tpu_custom_call.1} parent=1 // pred_check
      _
    $region87: #{tpu_custom_call.1} parent=1 // pred_check_branch
      %71 = sbr.rel (0) target = $region89
    $region88: #{tpu_custom_call.1} parent=1 // pred_region
      _
    $region89: #{tpu_custom_call.1} parent=1 // pred_fallthru
      _
    %v72 = vld [vmem:[%s0] sm:$0xff]
    %v73 = vld [vmem:[%s0 + $0x8] sm:$0xff]
    %v74 = vld [vmem:[%s1] sm:$0xff]
    %v75 = vadd.f32 %v72, %v74
    %v76 = vadd.f32 %v73, %v74
    %v77 = vld [vmem:[%s4] sm:$0x1]
    %v78 = vld [vmem:[%s5] sm:$0x1]
    %vm79 = vcmask 261120
    %v80 = vsel %vm79, %v75, 0.0
    %81 = vadd.xlane.f32.xlu0 %v80
    %v82 = vpop.xlane.xlu0 %81
    %v83 = vsel %vm79, %v76, 0.0
    %84 = vadd.xlane.f32.xlu0 %v83
    %v85 = vpop.xlane.xlu0 %84
    %v86 = vmul.f32 %v75, %v75
    %v87 = vmul.f32 %v76, %v76
    %v88 = vsel %vm79, %v86, 0.0
    %89 = vadd.xlane.f32.xlu0 %v88
    %v90 = vpop.xlane.xlu0 %89
    %v91 = vsel %vm79, %v87, 0.0
    %92 = vadd.xlane.f32.xlu0 %v91
    %v93 = vpop.xlane.xlu0 %92
    %v94 = vmul.f32 %v82, 0.03125
    %v95 = vmul.f32 %v85, 0.03125
    %v96 = vmul.f32 %v90, 0.03125
    %v97 = vmul.f32 %v93, 0.03125
    %v98 = vmul.f32 %v94, %v94
    %v99 = vmul.f32 %v95, %v95
    %v100 = vsub.f32 %v96, %v98
    %v101 = vsub.f32 %v97, %v99
    %v102 = vsub.f32 %v75, %v94
    %v103 = vsub.f32 %v76, %v95
    %v104 = vadd.f32 %v100, 1e-05
    %v105 = vadd.f32 %v101, 1e-05
    %v106 = vrsqrt.pop %v104
    %v107 = vrsqrt.pop %v105
    %v108 = vmul.f32 %v102, %v106
    %v109 = vmul.f32 %v103, %v107
    %v111 = vlaneseq
    %v112 = vshrl.u32 %v111, 7
    %v113 = vsub.s32 0, %v112
    %v114 = vrot.slane %v77, %v113
    %v116 = vmul.f32 %v108, %v114
    %v117 = vmul.f32 %v109, %v114
    %v119 = vlaneseq
    %v120 = vshrl.u32 %v119, 7
    %v121 = vsub.s32 0, %v120
    %v122 = vrot.slane %v78, %v121
    %v124 = vadd.f32 %v116, %v122
    %v125 = vadd.f32 %v117, %v122
    %v126 = vld [vmem:[%s3] sm:$0xff]
    %v127 = vld [vmem:[%s3 + $0x8] sm:$0xff]
    %v128 = vld [vmem:[%s2] sm:$0x1]
    %v130 = vlaneseq
    %v131 = vshrl.u32 %v130, 7
    %v132 = vsub.s32 0, %v131
    %v133 = vrot.slane %v128, %v132
    %v135 = vadd.f32 %v126, %v133
    %v136 = vadd.f32 %v127, %v133
    %v137 = vld [vmem:[%s6] sm:$0xff]
    %v138 = vld [vmem:[%s6 + $0x8] sm:$0xff]
    %v139 = vld [vmem:[%s6 + $0x10] sm:$0xff]
    %v140 = vld [vmem:[%s6 + $0x18] sm:$0xff]
    %v141 = vld [vmem:[%s6 + $0x20] sm:$0xff]
    %v142 = vld [vmem:[%s6 + $0x28] sm:$0xff]
    %v143 = vld [vmem:[%s6 + $0x30] sm:$0xff]
    %v144 = vld [vmem:[%s6 + $0x38] sm:$0xff]
    %v145 = vld [vmem:[%s6 + $0x40] sm:$0xff]
    %v146 = vld [vmem:[%s6 + $0x48] sm:$0xff]
    %v147 = vld [vmem:[%s6 + $0x50] sm:$0xff]
    %v148 = vld [vmem:[%s6 + $0x58] sm:$0xff]
    %v149 = vld [vmem:[%s7] sm:$0x7]
    %v151 = vlaneseq
    %v152 = vshrl.u32 %v151, 7
    %v153 = vsub.s32 0, %v152
    %v154 = vrot.slane %v149, %v153
    %v155 = vlaneseq
    %v156 = vshrl.u32 %v155, 7
    %v157 = vsub.s32 1, %v156
    %v158 = vrot.slane %v149, %v157
    %v159 = vlaneseq
    %v160 = vshrl.u32 %v159, 7
    %v161 = vsub.s32 2, %v160
    %v162 = vrot.slane %v149, %v161
    %v167 = vsel %vm79, %v124, 0
    %v170 = vsel %vm79, %v125, 0
    %172 = vmatprep.subr.mxu0 %v138
    %173 = vmatpush1.msra.mxu0 %v137
    %174 = vmatprep.subr.mxu0 %v141
    %175 = vmatpush1.msra.mxu0 %v140
    %176 = vmatprep.subr.mxu0 %v144
    %177 = vmatpush1.msra.mxu0 %v143
    %178 = vmatprep.subr.mxu0 %v147
    %179 = vmatpush1.msra.mxu0 %v146
    %180 = vmatprep.subr.mxu0 0.0
    %181 = vmatpush1.msra.mxu0 0.0
    %182 = vmatprep.subr.mxu0 0.0
    %183 = vmatpush1.msra.mxu0 0.0
    %184 = vmatprep.subr.mxu0 0.0
    %185 = vmatpush1.msra.mxu0 0.0
    %186 = vmatprep.subr.mxu0 0.0
    %187 = vmatpush1.msra.mxu0 0.0
    %188 = vmatprep.subr.mxu0 0.0
    %189 = vmatpush1.msra.mxu0 0.0
    %190 = vmatprep.subr.mxu0 0.0
    %191 = vmatpush1.msra.mxu0 0.0
    %192 = vmatprep.subr.mxu0 0.0
    %193 = vmatpush1.msra.mxu0 0.0
    %194 = vmatprep.subr.mxu0 0.0
    %195 = vmatpush1.msra.mxu0 0.0
    %196 = vmatprep.subr.mxu0 0.0
    %197 = vmatpush1.msra.mxu0 0.0
    %198 = vmatprep.subr.mxu0 0.0
    %199 = vmatpush1.msra.mxu0 0.0
    %200 = vmatprep.subr.mxu0 0.0
    %201 = vmatpush1.msra.mxu0 0.0
    %202 = vmatprep.subr.mxu0 0.0
    %203 = vmatpush1.msra.mxu0 0.0
    %204 = vmatprep.subr.mxu0 0.0
    %205 = vmatpush1.msra.mxu0 0.0
    %206 = vmatprep.subr.mxu0 0.0
    %207 = vmatpush1.msra.mxu0 0.0
    %208 = vmatprep.subr.mxu0 0.0
    %209 = vmatpush1.msra.mxu0 0.0
    %210 = vmatprep.subr.mxu0 0.0
    %211 = vmatpush1.msra.mxu0 0.0
    %212 = vmatprep.subr.mxu0 0.0
    %213 = vmatpush1.msra.mxu0 0.0
    %214 = vmatprep.subr.mxu0 0.0
    %215 = vmatpush1.msra.mxu0 0.0
    %216 = vmatprep.subr.mxu0 0.0
    %217 = vmatpush1.msra.mxu0 0.0
    %218 = vmatprep.subr.mxu0 0.0
    %219 = vmatpush1.msra.mxu0 0.0
    %220 = vmatprep.subr.mxu0 0.0
    %221 = vmatpush1.msra.mxu0 0.0
    %222 = vmatprep.subr.mxu0 0.0
    %223 = vmatpush1.msra.mxu0 0.0
    %224 = vmatprep.subr.mxu0 0.0
    %225 = vmatpush1.msra.mxu0 0.0
    %226 = vmatprep.subr.mxu0 0.0
    %227 = vmatpush1.msra.mxu0 0.0
    %228 = vmatprep.subr.mxu0 0.0
    %229 = vmatpush1.msra.mxu0 0.0
    %230 = vmatprep.subr.mxu0 0.0
    %231 = vmatpush1.msra.mxu0 0.0
    %232 = vmatprep.subr.mxu0 0.0
    %233 = vmatpush1.msra.mxu0 0.0
    %234 = vmatprep.subr.mxu0 0.0
    %235 = vmatpush1.msra.mxu0 0.0
    %236 = vmatprep.mubr.f32.mxu0 0.0
    %237 = vmatmul.mubr.f32.gmra.mrb[0].mxu0 %v167
    %v238 = vpop.f32.mrb[0].mxu0
    %v239 = vadd.f32 %v154, %v238
    %v240 = vpop.f32.mrb[0].mxu0
    %v241 = vadd.f32 %v158, %v240
    %242 = vmatprep.mubr.f32.mxu0 0.0
    %243 = vmatmul.mubr.f32.gmra.mrb[0].mxu0 %v170
    %v244 = vpop.f32.mrb[0].mxu0
    %v245 = vadd.f32 %v154, %v244
    %v246 = vpop.f32.mrb[0].mxu0
    %v247 = vadd.f32 %v158, %v246
    %248 = vdwg.mxu0
    %249 = vmatprep.subr.mxu0 0.0
    %250 = vmatpush1.msra.mxu0 %v139
    %251 = vmatprep.subr.mxu0 0.0
    %252 = vmatpush1.msra.mxu0 %v142
    %253 = vmatprep.subr.mxu0 0.0
    %254 = vmatpush1.msra.mxu0 %v145
    %255 = vmatprep.subr.mxu0 0.0
    %256 = vmatpush1.msra.mxu0 %v148
    %257 = vmatprep.subr.mxu0 0.0
    %258 = vmatpush1.msra.mxu0 0.0
    %259 = vmatprep.subr.mxu0 0.0
    %260 = vmatpush1.msra.mxu0 0.0
    %261 = vmatprep.subr.mxu0 0.0
    %262 = vmatpush1.msra.mxu0 0.0
    %263 = vmatprep.subr.mxu0 0.0
    %264 = vmatpush1.msra.mxu0 0.0
    %265 = vmatprep.subr.mxu0 0.0
    %266 = vmatpush1.msra.mxu0 0.0
    %267 = vmatprep.subr.mxu0 0.0
    %268 = vmatpush1.msra.mxu0 0.0
    %269 = vmatprep.subr.mxu0 0.0
    %270 = vmatpush1.msra.mxu0 0.0
    %271 = vmatprep.subr.mxu0 0.0
    %272 = vmatpush1.msra.mxu0 0.0
    %273 = vmatprep.subr.mxu0 0.0
    %274 = vmatpush1.msra.mxu0 0.0
    %275 = vmatprep.subr.mxu0 0.0
    %276 = vmatpush1.msra.mxu0 0.0
    %277 = vmatprep.subr.mxu0 0.0
    %278 = vmatpush1.msra.mxu0 0.0
    %279 = vmatprep.subr.mxu0 0.0
    %280 = vmatpush1.msra.mxu0 0.0
    %281 = vmatprep.subr.mxu0 0.0
    %282 = vmatpush1.msra.mxu0 0.0
    %283 = vmatprep.subr.mxu0 0.0
    %284 = vmatpush1.msra.mxu0 0.0
    %285 = vmatprep.subr.mxu0 0.0
    %286 = vmatpush1.msra.mxu0 0.0
    %287 = vmatprep.subr.mxu0 0.0
    %288 = vmatpush1.msra.mxu0 0.0
    %289 = vmatprep.subr.mxu0 0.0
    %290 = vmatpush1.msra.mxu0 0.0
    %291 = vmatprep.subr.mxu0 0.0
    %292 = vmatpush1.msra.mxu0 0.0
    %293 = vmatprep.subr.mxu0 0.0
    %294 = vmatpush1.msra.mxu0 0.0
    %295 = vmatprep.subr.mxu0 0.0
    %296 = vmatpush1.msra.mxu0 0.0
    %297 = vmatprep.subr.mxu0 0.0
    %298 = vmatpush1.msra.mxu0 0.0
    %299 = vmatprep.subr.mxu0 0.0
    %300 = vmatpush1.msra.mxu0 0.0
    %301 = vmatprep.subr.mxu0 0.0
    %302 = vmatpush1.msra.mxu0 0.0
    %303 = vmatprep.subr.mxu0 0.0
    %304 = vmatpush1.msra.mxu0 0.0
    %305 = vmatprep.subr.mxu0 0.0
    %306 = vmatpush1.msra.mxu0 0.0
    %307 = vmatprep.subr.mxu0 0.0
    %308 = vmatpush1.msra.mxu0 0.0
    %309 = vmatprep.subr.mxu0 0.0
    %310 = vmatpush1.msra.mxu0 0.0
    %311 = vmatprep.subr.mxu0 0.0
    %312 = vmatpush1.msra.mxu0 0.0
    %313 = vmatprep.mubr.f32.mxu0 0.0
    %314 = vmatmul.mubr.f32.gmra.mrb[0].mxu0 %v167
    %v315 = vpop.f32.mrb[0].mxu0
    %v316 = vadd.f32 %v162, %v315
    %v317 = vpop.f32.mrb[0].mxu0
    %318 = vmatprep.mubr.f32.mxu0 0.0
    %319 = vmatmul.mubr.f32.gmra.mrb[0].mxu0 %v170
    %v320 = vpop.f32.mrb[0].mxu0
    %v321 = vadd.f32 %v162, %v320
    %v322 = vpop.f32.mrb[0].mxu0
    %323 = vdwg.mxu0
    %324 = vmatprep.subr.mxu0 0.0
    %325 = vmatpush1.xpose.msra.mxu0 %v241
    %326 = vmatprep.subr.mxu0 0.0
    %327 = vmatpush1.xpose.msra.mxu0 %v247
    %328 = vmatprep.subr.mxu0 0.0
    %329 = vmatpush1.xpose.msra.mxu0 0.0
    %330 = vmatprep.subr.mxu0 0.0
    %331 = vmatpush1.xpose.msra.mxu0 0.0
    %332 = vmatprep.subr.mxu0 0.0
    %333 = vmatpush1.xpose.msra.mxu0 0.0
    %334 = vmatprep.subr.mxu0 0.0
    %335 = vmatpush1.xpose.msra.mxu0 0.0
    %336 = vmatprep.subr.mxu0 0.0
    %337 = vmatpush1.xpose.msra.mxu0 0.0
    %338 = vmatprep.subr.mxu0 0.0
    %339 = vmatpush1.xpose.msra.mxu0 0.0
    %340 = vmatprep.subr.mxu0 0.0
    %341 = vmatpush1.xpose.msra.mxu0 0.0
    %342 = vmatprep.subr.mxu0 0.0
    %343 = vmatpush1.xpose.msra.mxu0 0.0
    %344 = vmatprep.subr.mxu0 0.0
    %345 = vmatpush1.xpose.msra.mxu0 0.0
    %346 = vmatprep.subr.mxu0 0.0
    %347 = vmatpush1.xpose.msra.mxu0 0.0
    %348 = vmatprep.subr.mxu0 0.0
    %349 = vmatpush1.xpose.msra.mxu0 0.0
    %350 = vmatprep.subr.mxu0 0.0
    %351 = vmatpush1.xpose.msra.mxu0 0.0
    %352 = vmatprep.subr.mxu0 0.0
    %353 = vmatpush1.xpose.msra.mxu0 0.0
    %354 = vmatprep.subr.mxu0 0.0
    %355 = vmatpush1.xpose.msra.mxu0 0.0
    %356 = vmatprep.subr.mxu0 0.0
    %357 = vmatpush1.xpose.msra.mxu0 0.0
    %358 = vmatprep.subr.mxu0 0.0
    %359 = vmatpush1.xpose.msra.mxu0 0.0
    %360 = vmatprep.subr.mxu0 0.0
    %361 = vmatpush1.xpose.msra.mxu0 0.0
    %362 = vmatprep.subr.mxu0 0.0
    %363 = vmatpush1.xpose.msra.mxu0 0.0
    %364 = vmatprep.subr.mxu0 0.0
    %365 = vmatpush1.xpose.msra.mxu0 0.0
    %366 = vmatprep.subr.mxu0 0.0
    %367 = vmatpush1.xpose.msra.mxu0 0.0
    %368 = vmatprep.subr.mxu0 0.0
    %369 = vmatpush1.xpose.msra.mxu0 0.0
    %370 = vmatprep.subr.mxu0 0.0
    %371 = vmatpush1.xpose.msra.mxu0 0.0
    %372 = vmatprep.subr.mxu0 0.0
    %373 = vmatpush1.xpose.msra.mxu0 0.0
    %374 = vmatprep.subr.mxu0 0.0
    %375 = vmatpush1.xpose.msra.mxu0 0.0
    %376 = vmatprep.subr.mxu0 0.0
    %377 = vmatpush1.xpose.msra.mxu0 0.0
    %378 = vmatprep.subr.mxu0 0.0
    %379 = vmatpush1.xpose.msra.mxu0 0.0
    %380 = vmatprep.subr.mxu0 0.0
    %381 = vmatpush1.xpose.msra.mxu0 0.0
    %382 = vmatprep.subr.mxu0 0.0
    %383 = vmatpush1.xpose.msra.mxu0 0.0
    %384 = vmatprep.subr.mxu0 0.0
    %385 = vmatpush1.xpose.msra.mxu0 0.0
    %386 = vmatprep.subr.mxu0 0.0
    %387 = vmatpush1.xpose.msra.mxu0 0.0
    %388 = vmatprep.mubr.f32.mxu0 0.0
    %389 = vmatmul.mubr.f32.gmra.mrb[0].mxu0 %v239
    %v390 = vpop.f32.mrb[0].mxu0
    %v391 = vadd.f32 %v135, %v390
    %v392 = vpop.f32.mrb[0].mxu0
    %393 = vmatprep.mubr.f32.mxu0 0.0
    %394 = vmatmul.mubr.f32.gmra.mrb[0].mxu0 %v245
    %v395 = vpop.f32.mrb[0].mxu0
    %v396 = vadd.f32 %v136, %v395
    %v397 = vpop.f32.mrb[0].mxu0
    %398 = vdwg.mxu0
    %v399 = vmul.f32 %v391, 1.442695
    %v400 = vpow.pop %v399
    %v401 = vmul.f32 %v396, 1.442695
    %v402 = vpow.pop %v401
    %vm403 = vcmask 130048
    %v404 = vsel %vm403, %v400, 0.0
    %405 = vadd.xlane.f32.xlu0 %v404
    %v406 = vpop.xlane.xlu0 %405
    %v407 = vsel %vm403, %v402, 0.0
    %408 = vadd.xlane.f32.xlu0 %v407
    %v409 = vpop.xlane.xlu0 %408
    %v410 = vrcp.pop %v406
    %v411 = vrcp.pop %v409
    %v412 = vmul.f32 %v400, %v410
    %v413 = vmul.f32 %v402, %v411
    %v415 = vsel %vm403, %v412, 0
    %v418 = vsel %vm403, %v413, 0
    %420 = vmatprep.subr.mxu0 0.0
    %421 = vmatpush1.msra.mxu0 %v316
    %422 = vmatprep.subr.mxu0 0.0
    %423 = vmatpush1.msra.mxu0 %v321
    %424 = vmatprep.subr.mxu0 0.0
    %425 = vmatpush1.msra.mxu0 0.0
    %426 = vmatprep.subr.mxu0 0.0
    %427 = vmatpush1.msra.mxu0 0.0
    %428 = vmatprep.subr.mxu0 0.0
    %429 = vmatpush1.msra.mxu0 0.0
    %430 = vmatprep.subr.mxu0 0.0
    %431 = vmatpush1.msra.mxu0 0.0
    %432 = vmatprep.subr.mxu0 0.0
    %433 = vmatpush1.msra.mxu0 0.0
    %434 = vmatprep.subr.mxu0 0.0
    %435 = vmatpush1.msra.mxu0 0.0
    %436 = vmatprep.subr.mxu0 0.0
    %437 = vmatpush1.msra.mxu0 0.0
    %438 = vmatprep.subr.mxu0 0.0
    %439 = vmatpush1.msra.mxu0 0.0
    %440 = vmatprep.subr.mxu0 0.0
    %441 = vmatpush1.msra.mxu0 0.0
    %442 = vmatprep.subr.mxu0 0.0
    %443 = vmatpush1.msra.mxu0 0.0
    %444 = vmatprep.subr.mxu0 0.0
    %445 = vmatpush1.msra.mxu0 0.0
    %446 = vmatprep.subr.mxu0 0.0
    %447 = vmatpush1.msra.mxu0 0.0
    %448 = vmatprep.subr.mxu0 0.0
    %449 = vmatpush1.msra.mxu0 0.0
    %450 = vmatprep.subr.mxu0 0.0
    %451 = vmatpush1.msra.mxu0 0.0
    %452 = vmatprep.subr.mxu0 0.0
    %453 = vmatpush1.msra.mxu0 0.0
    %454 = vmatprep.subr.mxu0 0.0
    %455 = vmatpush1.msra.mxu0 0.0
    %456 = vmatprep.subr.mxu0 0.0
    %457 = vmatpush1.msra.mxu0 0.0
    %458 = vmatprep.subr.mxu0 0.0
    %459 = vmatpush1.msra.mxu0 0.0
    %460 = vmatprep.subr.mxu0 0.0
    %461 = vmatpush1.msra.mxu0 0.0
    %462 = vmatprep.subr.mxu0 0.0
    %463 = vmatpush1.msra.mxu0 0.0
    %464 = vmatprep.subr.mxu0 0.0
    %465 = vmatpush1.msra.mxu0 0.0
    %466 = vmatprep.subr.mxu0 0.0
    %467 = vmatpush1.msra.mxu0 0.0
    %468 = vmatprep.subr.mxu0 0.0
    %469 = vmatpush1.msra.mxu0 0.0
    %470 = vmatprep.subr.mxu0 0.0
    %471 = vmatpush1.msra.mxu0 0.0
    %472 = vmatprep.subr.mxu0 0.0
    %473 = vmatpush1.msra.mxu0 0.0
    %474 = vmatprep.subr.mxu0 0.0
    %475 = vmatpush1.msra.mxu0 0.0
    %476 = vmatprep.subr.mxu0 0.0
    %477 = vmatpush1.msra.mxu0 0.0
    %478 = vmatprep.subr.mxu0 0.0
    %479 = vmatpush1.msra.mxu0 0.0
    %480 = vmatprep.subr.mxu0 0.0
    %481 = vmatpush1.msra.mxu0 0.0
    %482 = vmatprep.subr.mxu0 0.0
    %483 = vmatpush1.msra.mxu0 0.0
    %484 = vmatprep.mubr.f32.mxu0 0.0
    %485 = vmatmul.mubr.f32.gmra.mrb[0].mxu0 %v415
    %v486 = vpop.f32.mrb[0].mxu0
    %v487 = vadd.f32 0.0, %v486
    %v488 = vpop.f32.mrb[0].mxu0
    %489 = vmatprep.mubr.f32.mxu0 0.0
    %490 = vmatmul.mubr.f32.gmra.mrb[0].mxu0 %v418
    %v491 = vpop.f32.mrb[0].mxu0
    %v492 = vadd.f32 0.0, %v491
    %v493 = vpop.f32.mrb[0].mxu0
    %494 = vdwg.mxu0
    %v495 = vld [vmem:[%s8] sm:$0xff]
    %v496 = vld [vmem:[%s8 + $0x8] sm:$0xff]
    %v497 = vld [vmem:[%s8 + $0x10] sm:$0xff]
    %v498 = vld [vmem:[%s8 + $0x18] sm:$0xff]
    %v499 = vld [vmem:[%s8 + $0x20] sm:$0xff]
    %v500 = vld [vmem:[%s8 + $0x28] sm:$0xff]
    %v501 = vld [vmem:[%s8 + $0x30] sm:$0xff]
    %v502 = vld [vmem:[%s8 + $0x38] sm:$0xff]
    %v503 = vld [vmem:[%s8 + $0x40] sm:$0xff]
    %v504 = vld [vmem:[%s8 + $0x48] sm:$0xff]
    %v505 = vld [vmem:[%s8 + $0x50] sm:$0xff]
    %v506 = vld [vmem:[%s8 + $0x58] sm:$0xff]
    %v507 = vld [vmem:[%s8 + $0x60] sm:$0xff]
    %v508 = vld [vmem:[%s8 + $0x68] sm:$0xff]
    %v509 = vld [vmem:[%s8 + $0x70] sm:$0xff]
    %v510 = vld [vmem:[%s8 + $0x78] sm:$0xff]
    %v511 = vld [vmem:[%s9] sm:$0x1]
    %v513 = vlaneseq
    %v514 = vshrl.u32 %v513, 7
    %v515 = vsub.s32 0, %v514
    %v516 = vrot.slane %v511, %v515
    %518 = vmatprep.subr.mxu0 0.0
    %519 = vmatpush1.msra.mxu0 %v495
    %520 = vmatprep.subr.mxu0 0.0
    %521 = vmatpush1.msra.mxu0 %v496
    %522 = vmatprep.subr.mxu0 0.0
    %523 = vmatpush1.msra.mxu0 %v497
    %524 = vmatprep.subr.mxu0 0.0
    %525 = vmatpush1.msra.mxu0 %v498
    %526 = vmatprep.subr.mxu0 0.0
    %527 = vmatpush1.msra.mxu0 %v499
    %528 = vmatprep.subr.mxu0 0.0
    %529 = vmatpush1.msra.mxu0 %v500
    %530 = vmatprep.subr.mxu0 0.0
    %531 = vmatpush1.msra.mxu0 %v501
    %532 = vmatprep.subr.mxu0 0.0
    %533 = vmatpush1.msra.mxu0 %v502
    %534 = vmatprep.subr.mxu0 0.0
    %535 = vmatpush1.msra.mxu0 %v503
    %536 = vmatprep.subr.mxu0 0.0
    %537 = vmatpush1.msra.mxu0 %v504
    %538 = vmatprep.subr.mxu0 0.0
    %539 = vmatpush1.msra.mxu0 %v505
    %540 = vmatprep.subr.mxu0 0.0
    %541 = vmatpush1.msra.mxu0 %v506
    %542 = vmatprep.subr.mxu0 0.0
    %543 = vmatpush1.msra.mxu0 %v507
    %544 = vmatprep.subr.mxu0 0.0
    %545 = vmatpush1.msra.mxu0 %v508
    %546 = vmatprep.subr.mxu0 0.0
    %547 = vmatpush1.msra.mxu0 %v509
    %548 = vmatprep.subr.mxu0 0.0
    %549 = vmatpush1.msra.mxu0 %v510
    %550 = vmatprep.subr.mxu0 0.0
    %551 = vmatpush1.msra.mxu0 0.0
    %552 = vmatprep.subr.mxu0 0.0
    %553 = vmatpush1.msra.mxu0 0.0
    %554 = vmatprep.subr.mxu0 0.0
    %555 = vmatpush1.msra.mxu0 0.0
    %556 = vmatprep.subr.mxu0 0.0
    %557 = vmatpush1.msra.mxu0 0.0
    %558 = vmatprep.subr.mxu0 0.0
    %559 = vmatpush1.msra.mxu0 0.0
    %560 = vmatprep.subr.mxu0 0.0
    %561 = vmatpush1.msra.mxu0 0.0
    %562 = vmatprep.subr.mxu0 0.0
    %563 = vmatpush1.msra.mxu0 0.0
    %564 = vmatprep.subr.mxu0 0.0
    %565 = vmatpush1.msra.mxu0 0.0
    %566 = vmatprep.subr.mxu0 0.0
    %567 = vmatpush1.msra.mxu0 0.0
    %568 = vmatprep.subr.mxu0 0.0
    %569 = vmatpush1.msra.mxu0 0.0
    %570 = vmatprep.subr.mxu0 0.0
    %571 = vmatpush1.msra.mxu0 0.0
    %572 = vmatprep.subr.mxu0 0.0
    %573 = vmatpush1.msra.mxu0 0.0
    %574 = vmatprep.subr.mxu0 0.0
    %575 = vmatpush1.msra.mxu0 0.0
    %576 = vmatprep.subr.mxu0 0.0
    %577 = vmatpush1.msra.mxu0 0.0
    %578 = vmatprep.subr.mxu0 0.0
    %579 = vmatpush1.msra.mxu0 0.0
    %580 = vmatprep.subr.mxu0 0.0
    %581 = vmatpush1.msra.mxu0 0.0
    %582 = vmatprep.mubr.f32.mxu0 0.0
    %583 = vmatmul.mubr.f32.gmra.mrb[0].mxu0 %v487
    %v584 = vpop.f32.mrb[0].mxu0
    %v585 = vadd.f32 %v516, %v584
    %v586 = vpop.f32.mrb[0].mxu0
    %587 = vmatprep.mubr.f32.mxu0 0.0
    %588 = vmatmul.mubr.f32.gmra.mrb[0].mxu0 %v492
    %v589 = vpop.f32.mrb[0].mxu0
    %v590 = vadd.f32 %v516, %v589
    %v591 = vpop.f32.mrb[0].mxu0
    %592 = vdwg.mxu0
    %v593 = vadd.f32 %v124, %v585
    %v594 = vadd.f32 %v125, %v590
    %v595 = vld [vmem:[%s10] sm:$0x1]
    %v596 = vld [vmem:[%s11] sm:$0x1]
    %v597 = vsel %vm79, %v593, 0.0
    %598 = vadd.xlane.f32.xlu0 %v597
    %v599 = vpop.xlane.xlu0 %598
    %v600 = vsel %vm79, %v594, 0.0
    %601 = vadd.xlane.f32.xlu0 %v600
    %v602 = vpop.xlane.xlu0 %601
    %v603 = vmul.f32 %v593, %v593
    %v604 = vmul.f32 %v594, %v594
    %v605 = vsel %vm79, %v603, 0.0
    %606 = vadd.xlane.f32.xlu0 %v605
    %v607 = vpop.xlane.xlu0 %606
    %v608 = vsel %vm79, %v604, 0.0
    %609 = vadd.xlane.f32.xlu0 %v608
    %v610 = vpop.xlane.xlu0 %609
    %v611 = vmul.f32 %v599, 0.03125
    %v612 = vmul.f32 %v602, 0.03125
    %v613 = vmul.f32 %v607, 0.03125
    %v614 = vmul.f32 %v610, 0.03125
    %v615 = vmul.f32 %v611, %v611
    %v616 = vmul.f32 %v612, %v612
    %v617 = vsub.f32 %v613, %v615
    %v618 = vsub.f32 %v614, %v616
    %v619 = vsub.f32 %v593, %v611
    %v620 = vsub.f32 %v594, %v612
    %v621 = vadd.f32 %v617, 1e-05
    %v622 = vadd.f32 %v618, 1e-05
    %v623 = vrsqrt.pop %v621
    %v624 = vrsqrt.pop %v622
    %v625 = vmul.f32 %v619, %v623
    %v626 = vmul.f32 %v620, %v624
    %v628 = vlaneseq
    %v629 = vshrl.u32 %v628, 7
    %v630 = vsub.s32 0, %v629
    %v631 = vrot.slane %v595, %v630
    %v633 = vmul.f32 %v625, %v631
    %v634 = vmul.f32 %v626, %v631
    %v636 = vlaneseq
    %v637 = vshrl.u32 %v636, 7
    %v638 = vsub.s32 0, %v637
    %v639 = vrot.slane %v596, %v638
    %v641 = vadd.f32 %v633, %v639
    %v642 = vadd.f32 %v634, %v639
    %v643 = vld [vmem:[%s12] sm:$0xff]
    %v644 = vld [vmem:[%s12 + $0x8] sm:$0xff]
    %v645 = vld [vmem:[%s12 + $0x10] sm:$0xff]
    %v646 = vld [vmem:[%s12 + $0x18] sm:$0xff]
    %v647 = vld [vmem:[%s13] sm:$0x1]
    %v649 = vlaneseq
    %v650 = vshrl.u32 %v649, 7
    %v651 = vsub.s32 0, %v650
    %v652 = vrot.slane %v647, %v651
    %v655 = vsel %vm79, %v641, 0
    %v658 = vsel %vm79, %v642, 0
    %660 = vmatprep.subr.mxu0 0.0
    %661 = vmatpush1.msra.mxu0 %v643
    %662 = vmatprep.subr.mxu0 0.0
    %663 = vmatpush1.msra.mxu0 %v644
    %664 = vmatprep.subr.mxu0 0.0
    %665 = vmatpush1.msra.mxu0 %v645
    %666 = vmatprep.subr.mxu0 0.0
    %667 = vmatpush1.msra.mxu0 %v646
    %668 = vmatprep.subr.mxu0 0.0
    %669 = vmatpush1.msra.mxu0 0.0
    %670 = vmatprep.subr.mxu0 0.0
    %671 = vmatpush1.msra.mxu0 0.0
    %672 = vmatprep.subr.mxu0 0.0
    %673 = vmatpush1.msra.mxu0 0.0
    %674 = vmatprep.subr.mxu0 0.0
    %675 = vmatpush1.msra.mxu0 0.0
    %676 = vmatprep.subr.mxu0 0.0
    %677 = vmatpush1.msra.mxu0 0.0
    %678 = vmatprep.subr.mxu0 0.0
    %679 = vmatpush1.msra.mxu0 0.0
    %680 = vmatprep.subr.mxu0 0.0
    %681 = vmatpush1.msra.mxu0 0.0
    %682 = vmatprep.subr.mxu0 0.0
    %683 = vmatpush1.msra.mxu0 0.0
    %684 = vmatprep.subr.mxu0 0.0
    %685 = vmatpush1.msra.mxu0 0.0
    %686 = vmatprep.subr.mxu0 0.0
    %687 = vmatpush1.msra.mxu0 0.0
    %688 = vmatprep.subr.mxu0 0.0
    %689 = vmatpush1.msra.mxu0 0.0
    %690 = vmatprep.subr.mxu0 0.0
    %691 = vmatpush1.msra.mxu0 0.0
    %692 = vmatprep.subr.mxu0 0.0
    %693 = vmatpush1.msra.mxu0 0.0
    %694 = vmatprep.subr.mxu0 0.0
    %695 = vmatpush1.msra.mxu0 0.0
    %696 = vmatprep.subr.mxu0 0.0
    %697 = vmatpush1.msra.mxu0 0.0
    %698 = vmatprep.subr.mxu0 0.0
    %699 = vmatpush1.msra.mxu0 0.0
    %700 = vmatprep.subr.mxu0 0.0
    %701 = vmatpush1.msra.mxu0 0.0
    %702 = vmatprep.subr.mxu0 0.0
    %703 = vmatpush1.msra.mxu0 0.0
    %704 = vmatprep.subr.mxu0 0.0
    %705 = vmatpush1.msra.mxu0 0.0
    %706 = vmatprep.subr.mxu0 0.0
    %707 = vmatpush1.msra.mxu0 0.0
    %708 = vmatprep.subr.mxu0 0.0
    %709 = vmatpush1.msra.mxu0 0.0
    %710 = vmatprep.subr.mxu0 0.0
    %711 = vmatpush1.msra.mxu0 0.0
    %712 = vmatprep.subr.mxu0 0.0
    %713 = vmatpush1.msra.mxu0 0.0
    %714 = vmatprep.subr.mxu0 0.0
    %715 = vmatpush1.msra.mxu0 0.0
    %716 = vmatprep.subr.mxu0 0.0
    %717 = vmatpush1.msra.mxu0 0.0
    %718 = vmatprep.subr.mxu0 0.0
    %719 = vmatpush1.msra.mxu0 0.0
    %720 = vmatprep.subr.mxu0 0.0
    %721 = vmatpush1.msra.mxu0 0.0
    %722 = vmatprep.subr.mxu0 0.0
    %723 = vmatpush1.msra.mxu0 0.0
    %724 = vmatprep.mubr.f32.mxu0 0.0
    %725 = vmatmul.mubr.f32.gmra.mrb[0].mxu0 %v655
    %v726 = vpop.f32.mrb[0].mxu0
    %v727 = vadd.f32 %v652, %v726
    %v728 = vpop.f32.mrb[0].mxu0
    %729 = vmatprep.mubr.f32.mxu0 0.0
    %730 = vmatmul.mubr.f32.gmra.mrb[0].mxu0 %v658
    %v731 = vpop.f32.mrb[0].mxu0
    %v732 = vadd.f32 %v652, %v731
    %v733 = vpop.f32.mrb[0].mxu0
    %734 = vdwg.mxu0
    %v735 = vmul.f32 %v727, %v727
    %v736 = vmul.f32 %v732, %v732
    %v737 = vmul.f32 %v727, %v735
    %v738 = vmul.f32 %v732, %v736
    %v739 = vmul.f32 %v737, 0.044715
    %v740 = vmul.f32 %v738, 0.044715
    %v741 = vadd.f32 %v727, %v739
    %v742 = vadd.f32 %v732, %v740
    %v743 = vmul.f32 %v741, 0.7978846
    %v744 = vmul.f32 %v742, 0.7978846
    %v745 = vtanh.pop %v743
    %v746 = vtanh.pop %v744
    %v747 = vadd.f32 %v745, 1.0
    %v748 = vadd.f32 %v746, 1.0
    %v749 = vmul.f32 %v747, 0.5
    %v750 = vmul.f32 %v748, 0.5
    %v751 = vmul.f32 %v727, %v749
    %v752 = vmul.f32 %v732, %v750
    %v753 = vld [vmem:[%s14] sm:$0xff]
    %v754 = vld [vmem:[%s14 + $0x8] sm:$0xff]
    %v755 = vld [vmem:[%s14 + $0x10] sm:$0xff]
    %v756 = vld [vmem:[%s14 + $0x18] sm:$0xff]
    %v757 = vld [vmem:[%s14 + $0x20] sm:$0xff]
    %v758 = vld [vmem:[%s14 + $0x28] sm:$0xff]
    %v759 = vld [vmem:[%s14 + $0x30] sm:$0xff]
    %v760 = vld [vmem:[%s14 + $0x38] sm:$0xff]
    %v761 = vld [vmem:[%s15] sm:$0x1]
    %v763 = vlaneseq
    %v764 = vshrl.u32 %v763, 7
    %v765 = vsub.s32 0, %v764
    %v766 = vrot.slane %v761, %v765
    %vm768 = vcmask 523264
    %v770 = vsel %vm768, %v751, 0
    %v773 = vsel %vm768, %v752, 0
    %775 = vmatprep.subr.mxu0 0.0
    %776 = vmatpush1.msra.mxu0 %v753
    %777 = vmatprep.subr.mxu0 0.0
    %778 = vmatpush1.msra.mxu0 %v754
    %779 = vmatprep.subr.mxu0 0.0
    %780 = vmatpush1.msra.mxu0 %v755
    %781 = vmatprep.subr.mxu0 0.0
    %782 = vmatpush1.msra.mxu0 %v756
    %783 = vmatprep.subr.mxu0 0.0
    %784 = vmatpush1.msra.mxu0 %v757
    %785 = vmatprep.subr.mxu0 0.0
    %786 = vmatpush1.msra.mxu0 %v758
    %787 = vmatprep.subr.mxu0 0.0
    %788 = vmatpush1.msra.mxu0 %v759
    %789 = vmatprep.subr.mxu0 0.0
    %790 = vmatpush1.msra.mxu0 %v760
    %791 = vmatprep.subr.mxu0 0.0
    %792 = vmatpush1.msra.mxu0 0.0
    %793 = vmatprep.subr.mxu0 0.0
    %794 = vmatpush1.msra.mxu0 0.0
    %795 = vmatprep.subr.mxu0 0.0
    %796 = vmatpush1.msra.mxu0 0.0
    %797 = vmatprep.subr.mxu0 0.0
    %798 = vmatpush1.msra.mxu0 0.0
    %799 = vmatprep.subr.mxu0 0.0
    %800 = vmatpush1.msra.mxu0 0.0
    %801 = vmatprep.subr.mxu0 0.0
    %802 = vmatpush1.msra.mxu0 0.0
    %803 = vmatprep.subr.mxu0 0.0
    %804 = vmatpush1.msra.mxu0 0.0
    %805 = vmatprep.subr.mxu0 0.0
    %806 = vmatpush1.msra.mxu0 0.0
    %807 = vmatprep.subr.mxu0 0.0
    %808 = vmatpush1.msra.mxu0 0.0
    %809 = vmatprep.subr.mxu0 0.0
    %810 = vmatpush1.msra.mxu0 0.0
    %811 = vmatprep.subr.mxu0 0.0
    %812 = vmatpush1.msra.mxu0 0.0
    %813 = vmatprep.subr.mxu0 0.0
    %814 = vmatpush1.msra.mxu0 0.0
    %815 = vmatprep.subr.mxu0 0.0
    %816 = vmatpush1.msra.mxu0 0.0
    %817 = vmatprep.subr.mxu0 0.0
    %818 = vmatpush1.msra.mxu0 0.0
    %819 = vmatprep.subr.mxu0 0.0
    %820 = vmatpush1.msra.mxu0 0.0
    %821 = vmatprep.subr.mxu0 0.0
    %822 = vmatpush1.msra.mxu0 0.0
    %823 = vmatprep.subr.mxu0 0.0
    %824 = vmatpush1.msra.mxu0 0.0
    %825 = vmatprep.subr.mxu0 0.0
    %826 = vmatpush1.msra.mxu0 0.0
    %827 = vmatprep.subr.mxu0 0.0
    %828 = vmatpush1.msra.mxu0 0.0
    %829 = vmatprep.subr.mxu0 0.0
    %830 = vmatpush1.msra.mxu0 0.0
    %831 = vmatprep.subr.mxu0 0.0
    %832 = vmatpush1.msra.mxu0 0.0
    %833 = vmatprep.subr.mxu0 0.0
    %834 = vmatpush1.msra.mxu0 0.0
    %835 = vmatprep.subr.mxu0 0.0
    %836 = vmatpush1.msra.mxu0 0.0
    %837 = vmatprep.subr.mxu0 0.0
    %838 = vmatpush1.msra.mxu0 0.0
    %839 = vmatprep.mubr.f32.mxu0 0.0
    %840 = vmatmul.mubr.f32.gmra.mrb[0].mxu0 %v770
    %v841 = vpop.f32.mrb[0].mxu0
    %v842 = vadd.f32 %v766, %v841
    %v843 = vpop.f32.mrb[0].mxu0
    %844 = vmatprep.mubr.f32.mxu0 0.0
    %845 = vmatmul.mubr.f32.gmra.mrb[0].mxu0 %v773
    %v846 = vpop.f32.mrb[0].mxu0
    %v847 = vadd.f32 %v766, %v846
    %v848 = vpop.f32.mrb[0].mxu0
    %849 = vdwg.mxu0
    %v850 = vadd.f32 %v641, %v842
    %v851 = vadd.f32 %v642, %v847
    %v852 = vld [vmem:[%s16] sm:$0x1]
    %v853 = vld [vmem:[%s17] sm:$0x1]
    %v854 = vsel %vm79, %v850, 0.0
    %855 = vadd.xlane.f32.xlu0 %v854
    %v856 = vpop.xlane.xlu0 %855
    %v857 = vsel %vm79, %v851, 0.0
    %858 = vadd.xlane.f32.xlu0 %v857
    %v859 = vpop.xlane.xlu0 %858
    %v860 = vmul.f32 %v850, %v850
    %v861 = vmul.f32 %v851, %v851
    %v862 = vsel %vm79, %v860, 0.0
    %863 = vadd.xlane.f32.xlu0 %v862
    %v864 = vpop.xlane.xlu0 %863
    %v865 = vsel %vm79, %v861, 0.0
    %866 = vadd.xlane.f32.xlu0 %v865
    %v867 = vpop.xlane.xlu0 %866
    %v868 = vmul.f32 %v856, 0.03125
    %v869 = vmul.f32 %v859, 0.03125
    %v870 = vmul.f32 %v864, 0.03125
    %v871 = vmul.f32 %v867, 0.03125
    %v872 = vmul.f32 %v868, %v868
    %v873 = vmul.f32 %v869, %v869
    %v874 = vsub.f32 %v870, %v872
    %v875 = vsub.f32 %v871, %v873
    %v876 = vsub.f32 %v850, %v868
    %v877 = vsub.f32 %v851, %v869
    %v878 = vadd.f32 %v874, 1e-05
    %v879 = vadd.f32 %v875, 1e-05
    %v880 = vrsqrt.pop %v878
    %v881 = vrsqrt.pop %v879
    %v882 = vmul.f32 %v876, %v880
    %v883 = vmul.f32 %v877, %v881
    %v885 = vlaneseq
    %v886 = vshrl.u32 %v885, 7
    %v887 = vsub.s32 0, %v886
    %v888 = vrot.slane %v852, %v887
    %v890 = vmul.f32 %v882, %v888
    %v891 = vmul.f32 %v883, %v888
    %v893 = vlaneseq
    %v894 = vshrl.u32 %v893, 7
    %v895 = vsub.s32 0, %v894
    %v896 = vrot.slane %v853, %v895
    %v898 = vadd.f32 %v890, %v896
    %v899 = vadd.f32 %v891, %v896
    %s900 = scalar_lea.vmem %s6, 96
    %v901 = vld [vmem:[%s900] sm:$0xff]
    %v902 = vld [vmem:[%s900 + $0x8] sm:$0xff]
    %v903 = vld [vmem:[%s900 + $0x10] sm:$0xff]
    %v904 = vld [vmem:[%s900 + $0x18] sm:$0xff]
    %v905 = vld [vmem:[%s900 + $0x20] sm:$0xff]
    %v906 = vld [vmem:[%s900 + $0x28] sm:$0xff]
    %v907 = vld [vmem:[%s900 + $0x30] sm:$0xff]
    %v908 = vld [vmem:[%s900 + $0x38] sm:$0xff]
    %v909 = vld [vmem:[%s900 + $0x40] sm:$0xff]
    %v910 = vld [vmem:[%s900 + $0x48] sm:$0xff]
    %v911 = vld [vmem:[%s900 + $0x50] sm:$0xff]
    %v912 = vld [vmem:[%s900 + $0x58] sm:$0xff]
    %s913 = scalar_lea.vmem %s7, 3
    %v914 = vld [vmem:[%s913] sm:$0x7]
    %v916 = vlaneseq
    %v917 = vshrl.u32 %v916, 7
    %v918 = vsub.s32 0, %v917
    %v919 = vrot.slane %v914, %v918
    %v920 = vlaneseq
    %v921 = vshrl.u32 %v920, 7
    %v922 = vsub.s32 1, %v921
    %v923 = vrot.slane %v914, %v922
    %v924 = vlaneseq
    %v925 = vshrl.u32 %v924, 7
    %v926 = vsub.s32 2, %v925
    %v927 = vrot.slane %v914, %v926
    %v932 = vsel %vm79, %v898, 0
    %v935 = vsel %vm79, %v899, 0
    %937 = vmatprep.subr.mxu0 %v902
    %938 = vmatpush1.msra.mxu0 %v901
    %939 = vmatprep.subr.mxu0 %v905
    %940 = vmatpush1.msra.mxu0 %v904
    %941 = vmatprep.subr.mxu0 %v908
    %942 = vmatpush1.msra.mxu0 %v907
    %943 = vmatprep.subr.mxu0 %v911
    %944 = vmatpush1.msra.mxu0 %v910
    %945 = vmatprep.subr.mxu0 0.0
    %946 = vmatpush1.msra.mxu0 0.0
    %947 = vmatprep.subr.mxu0 0.0
    %948 = vmatpush1.msra.mxu0 0.0
    %949 = vmatprep.subr.mxu0 0.0
    %950 = vmatpush1.msra.mxu0 0.0
    %951 = vmatprep.subr.mxu0 0.0
    %952 = vmatpush1.msra.mxu0 0.0
    %953 = vmatprep.subr.mxu0 0.0
    %954 = vmatpush1.msra.mxu0 0.0
    %955 = vmatprep.subr.mxu0 0.0
    %956 = vmatpush1.msra.mxu0 0.0
    %957 = vmatprep.subr.mxu0 0.0
    %958 = vmatpush1.msra.mxu0 0.0
    %959 = vmatprep.subr.mxu0 0.0
    %960 = vmatpush1.msra.mxu0 0.0
    %961 = vmatprep.subr.mxu0 0.0
    %962 = vmatpush1.msra.mxu0 0.0
    %963 = vmatprep.subr.mxu0 0.0
    %964 = vmatpush1.msra.mxu0 0.0
    %965 = vmatprep.subr.mxu0 0.0
    %966 = vmatpush1.msra.mxu0 0.0
    %967 = vmatprep.subr.mxu0 0.0
    %968 = vmatpush1.msra.mxu0 0.0
    %969 = vmatprep.subr.mxu0 0.0
    %970 = vmatpush1.msra.mxu0 0.0
    %971 = vmatprep.subr.mxu0 0.0
    %972 = vmatpush1.msra.mxu0 0.0
    %973 = vmatprep.subr.mxu0 0.0
    %974 = vmatpush1.msra.mxu0 0.0
    %975 = vmatprep.subr.mxu0 0.0
    %976 = vmatpush1.msra.mxu0 0.0
    %977 = vmatprep.subr.mxu0 0.0
    %978 = vmatpush1.msra.mxu0 0.0
    %979 = vmatprep.subr.mxu0 0.0
    %980 = vmatpush1.msra.mxu0 0.0
    %981 = vmatprep.subr.mxu0 0.0
    %982 = vmatpush1.msra.mxu0 0.0
    %983 = vmatprep.subr.mxu0 0.0
    %984 = vmatpush1.msra.mxu0 0.0
    %985 = vmatprep.subr.mxu0 0.0
    %986 = vmatpush1.msra.mxu0 0.0
    %987 = vmatprep.subr.mxu0 0.0
    %988 = vmatpush1.msra.mxu0 0.0
    %989 = vmatprep.subr.mxu0 0.0
    %990 = vmatpush1.msra.mxu0 0.0
    %991 = vmatprep.subr.mxu0 0.0
    %992 = vmatpush1.msra.mxu0 0.0
    %993 = vmatprep.subr.mxu0 0.0
    %994 = vmatpush1.msra.mxu0 0.0
    %995 = vmatprep.subr.mxu0 0.0
    %996 = vmatpush1.msra.mxu0 0.0
    %997 = vmatprep.subr.mxu0 0.0
    %998 = vmatpush1.msra.mxu0 0.0
    %999 = vmatprep.subr.mxu0 0.0
    %1000 = vmatpush1.msra.mxu0 0.0
    %1001 = vmatprep.mubr.f32.mxu0 0.0
    %1002 = vmatmul.mubr.f32.gmra.mrb[0].mxu0 %v932
    %v1003 = vpop.f32.mrb[0].mxu0
    %v1004 = vadd.f32 %v919, %v1003
    %v1005 = vpop.f32.mrb[0].mxu0
    %v1006 = vadd.f32 %v923, %v1005
    %1007 = vmatprep.mubr.f32.mxu0 0.0
    %1008 = vmatmul.mubr.f32.gmra.mrb[0].mxu0 %v935
    %v1009 = vpop.f32.mrb[0].mxu0
    %v1010 = vadd.f32 %v919, %v1009
    %v1011 = vpop.f32.mrb[0].mxu0
    %v1012 = vadd.f32 %v923, %v1011
    %1013 = vdwg.mxu0
    %1014 = vmatprep.subr.mxu0 0.0
    %1015 = vmatpush1.msra.mxu0 %v903
    %1016 = vmatprep.subr.mxu0 0.0
    %1017 = vmatpush1.msra.mxu0 %v906
    %1018 = vmatprep.subr.mxu0 0.0
    %1019 = vmatpush1.msra.mxu0 %v909
    %1020 = vmatprep.subr.mxu0 0.0
    %1021 = vmatpush1.msra.mxu0 %v912
    %1022 = vmatprep.subr.mxu0 0.0
    %1023 = vmatpush1.msra.mxu0 0.0
    %1024 = vmatprep.subr.mxu0 0.0
    %1025 = vmatpush1.msra.mxu0 0.0
    %1026 = vmatprep.subr.mxu0 0.0
    %1027 = vmatpush1.msra.mxu0 0.0
    %1028 = vmatprep.subr.mxu0 0.0
    %1029 = vmatpush1.msra.mxu0 0.0
    %1030 = vmatprep.subr.mxu0 0.0
    %1031 = vmatpush1.msra.mxu0 0.0
    %1032 = vmatprep.subr.mxu0 0.0
    %1033 = vmatpush1.msra.mxu0 0.0
    %1034 = vmatprep.subr.mxu0 0.0
    %1035 = vmatpush1.msra.mxu0 0.0
    %1036 = vmatprep.subr.mxu0 0.0
    %1037 = vmatpush1.msra.mxu0 0.0
    %1038 = vmatprep.subr.mxu0 0.0
    %1039 = vmatpush1.msra.mxu0 0.0
    %1040 = vmatprep.subr.mxu0 0.0
    %1041 = vmatpush1.msra.mxu0 0.0
    %1042 = vmatprep.subr.mxu0 0.0
    %1043 = vmatpush1.msra.mxu0 0.0
    %1044 = vmatprep.subr.mxu0 0.0
    %1045 = vmatpush1.msra.mxu0 0.0
    %1046 = vmatprep.subr.mxu0 0.0
    %1047 = vmatpush1.msra.mxu0 0.0
    %1048 = vmatprep.subr.mxu0 0.0
    %1049 = vmatpush1.msra.mxu0 0.0
    %1050 = vmatprep.subr.mxu0 0.0
    %1051 = vmatpush1.msra.mxu0 0.0
    %1052 = vmatprep.subr.mxu0 0.0
    %1053 = vmatpush1.msra.mxu0 0.0
    %1054 = vmatprep.subr.mxu0 0.0
    %1055 = vmatpush1.msra.mxu0 0.0
    %1056 = vmatprep.subr.mxu0 0.0
    %1057 = vmatpush1.msra.mxu0 0.0
    %1058 = vmatprep.subr.mxu0 0.0
    %1059 = vmatpush1.msra.mxu0 0.0
    %1060 = vmatprep.subr.mxu0 0.0
    %1061 = vmatpush1.msra.mxu0 0.0
    %1062 = vmatprep.subr.mxu0 0.0
    %1063 = vmatpush1.msra.mxu0 0.0
    %1064 = vmatprep.subr.mxu0 0.0
    %1065 = vmatpush1.msra.mxu0 0.0
    %1066 = vmatprep.subr.mxu0 0.0
    %1067 = vmatpush1.msra.mxu0 0.0
    %1068 = vmatprep.subr.mxu0 0.0
    %1069 = vmatpush1.msra.mxu0 0.0
    %1070 = vmatprep.subr.mxu0 0.0
    %1071 = vmatpush1.msra.mxu0 0.0
    %1072 = vmatprep.subr.mxu0 0.0
    %1073 = vmatpush1.msra.mxu0 0.0
    %1074 = vmatprep.subr.mxu0 0.0
    %1075 = vmatpush1.msra.mxu0 0.0
    %1076 = vmatprep.subr.mxu0 0.0
    %1077 = vmatpush1.msra.mxu0 0.0
    %1078 = vmatprep.mubr.f32.mxu0 0.0
    %1079 = vmatmul.mubr.f32.gmra.mrb[0].mxu0 %v932
    %v1080 = vpop.f32.mrb[0].mxu0
    %v1081 = vadd.f32 %v927, %v1080
    %v1082 = vpop.f32.mrb[0].mxu0
    %1083 = vmatprep.mubr.f32.mxu0 0.0
    %1084 = vmatmul.mubr.f32.gmra.mrb[0].mxu0 %v935
    %v1085 = vpop.f32.mrb[0].mxu0
    %v1086 = vadd.f32 %v927, %v1085
    %v1087 = vpop.f32.mrb[0].mxu0
    %1088 = vdwg.mxu0
    %1089 = vmatprep.subr.mxu0 0.0
    %1090 = vmatpush1.xpose.msra.mxu0 %v1006
    %1091 = vmatprep.subr.mxu0 0.0
    %1092 = vmatpush1.xpose.msra.mxu0 %v1012
    %1093 = vmatprep.subr.mxu0 0.0
    %1094 = vmatpush1.xpose.msra.mxu0 0.0
    %1095 = vmatprep.subr.mxu0 0.0
    %1096 = vmatpush1.xpose.msra.mxu0 0.0
    %1097 = vmatprep.subr.mxu0 0.0
    %1098 = vmatpush1.xpose.msra.mxu0 0.0
    %1099 = vmatprep.subr.mxu0 0.0
    %1100 = vmatpush1.xpose.msra.mxu0 0.0
    %1101 = vmatprep.subr.mxu0 0.0
    %1102 = vmatpush1.xpose.msra.mxu0 0.0
    %1103 = vmatprep.subr.mxu0 0.0
    %1104 = vmatpush1.xpose.msra.mxu0 0.0
    %1105 = vmatprep.subr.mxu0 0.0
    %1106 = vmatpush1.xpose.msra.mxu0 0.0
    %1107 = vmatprep.subr.mxu0 0.0
    %1108 = vmatpush1.xpose.msra.mxu0 0.0
    %1109 = vmatprep.subr.mxu0 0.0
    %1110 = vmatpush1.xpose.msra.mxu0 0.0
    %1111 = vmatprep.subr.mxu0 0.0
    %1112 = vmatpush1.xpose.msra.mxu0 0.0
    %1113 = vmatprep.subr.mxu0 0.0
    %1114 = vmatpush1.xpose.msra.mxu0 0.0
    %1115 = vmatprep.subr.mxu0 0.0
    %1116 = vmatpush1.xpose.msra.mxu0 0.0
    %1117 = vmatprep.subr.mxu0 0.0
    %1118 = vmatpush1.xpose.msra.mxu0 0.0
    %1119 = vmatprep.subr.mxu0 0.0
    %1120 = vmatpush1.xpose.msra.mxu0 0.0
    %1121 = vmatprep.subr.mxu0 0.0
    %1122 = vmatpush1.xpose.msra.mxu0 0.0
    %1123 = vmatprep.subr.mxu0 0.0
    %1124 = vmatpush1.xpose.msra.mxu0 0.0
    %1125 = vmatprep.subr.mxu0 0.0
    %1126 = vmatpush1.xpose.msra.mxu0 0.0
    %1127 = vmatprep.subr.mxu0 0.0
    %1128 = vmatpush1.xpose.msra.mxu0 0.0
    %1129 = vmatprep.subr.mxu0 0.0
    %1130 = vmatpush1.xpose.msra.mxu0 0.0
    %1131 = vmatprep.subr.mxu0 0.0
    %1132 = vmatpush1.xpose.msra.mxu0 0.0
    %1133 = vmatprep.subr.mxu0 0.0
    %1134 = vmatpush1.xpose.msra.mxu0 0.0
    %1135 = vmatprep.subr.mxu0 0.0
    %1136 = vmatpush1.xpose.msra.mxu0 0.0
    %1137 = vmatprep.subr.mxu0 0.0
    %1138 = vmatpush1.xpose.msra.mxu0 0.0
    %1139 = vmatprep.subr.mxu0 0.0
    %1140 = vmatpush1.xpose.msra.mxu0 0.0
    %1141 = vmatprep.subr.mxu0 0.0
    %1142 = vmatpush1.xpose.msra.mxu0 0.0
    %1143 = vmatprep.subr.mxu0 0.0
    %1144 = vmatpush1.xpose.msra.mxu0 0.0
    %1145 = vmatprep.subr.mxu0 0.0
    %1146 = vmatpush1.xpose.msra.mxu0 0.0
    %1147 = vmatprep.subr.mxu0 0.0
    %1148 = vmatpush1.xpose.msra.mxu0 0.0
    %1149 = vmatprep.subr.mxu0 0.0
    %1150 = vmatpush1.xpose.msra.mxu0 0.0
    %1151 = vmatprep.subr.mxu0 0.0
    %1152 = vmatpush1.xpose.msra.mxu0 0.0
    %1153 = vmatprep.mubr.f32.mxu0 0.0
    %1154 = vmatmul.mubr.f32.gmra.mrb[0].mxu0 %v1004
    %v1155 = vpop.f32.mrb[0].mxu0
    %v1156 = vadd.f32 %v135, %v1155
    %v1157 = vpop.f32.mrb[0].mxu0
    %1158 = vmatprep.mubr.f32.mxu0 0.0
    %1159 = vmatmul.mubr.f32.gmra.mrb[0].mxu0 %v1010
    %v1160 = vpop.f32.mrb[0].mxu0
    %v1161 = vadd.f32 %v136, %v1160
    %v1162 = vpop.f32.mrb[0].mxu0
    %1163 = vdwg.mxu0
    %v1164 = vmul.f32 %v1156, 1.442695
    %v1165 = vpow.pop %v1164
    %v1166 = vmul.f32 %v1161, 1.442695
    %v1167 = vpow.pop %v1166
    %v1168 = vsel %vm403, %v1165, 0.0
    %1169 = vadd.xlane.f32.xlu0 %v1168
    %v1170 = vpop.xlane.xlu0 %1169
    %v1171 = vsel %vm403, %v1167, 0.0
    %1172 = vadd.xlane.f32.xlu0 %v1171
    %v1173 = vpop.xlane.xlu0 %1172
    %v1174 = vrcp.pop %v1170
    %v1175 = vrcp.pop %v1173
    %v1176 = vmul.f32 %v1165, %v1174
    %v1177 = vmul.f32 %v1167, %v1175
    %v1179 = vsel %vm403, %v1176, 0
    %v1182 = vsel %vm403, %v1177, 0
    %1184 = vmatprep.subr.mxu0 0.0
    %1185 = vmatpush1.msra.mxu0 %v1081
    %1186 = vmatprep.subr.mxu0 0.0
    %1187 = vmatpush1.msra.mxu0 %v1086
    %1188 = vmatprep.subr.mxu0 0.0
    %1189 = vmatpush1.msra.mxu0 0.0
    %1190 = vmatprep.subr.mxu0 0.0
    %1191 = vmatpush1.msra.mxu0 0.0
    %1192 = vmatprep.subr.mxu0 0.0
    %1193 = vmatpush1.msra.mxu0 0.0
    %1194 = vmatprep.subr.mxu0 0.0
    %1195 = vmatpush1.msra.mxu0 0.0
    %1196 = vmatprep.subr.mxu0 0.0
    %1197 = vmatpush1.msra.mxu0 0.0
    %1198 = vmatprep.subr.mxu0 0.0
    %1199 = vmatpush1.msra.mxu0 0.0
    %1200 = vmatprep.subr.mxu0 0.0
    %1201 = vmatpush1.msra.mxu0 0.0
    %1202 = vmatprep.subr.mxu0 0.0
    %1203 = vmatpush1.msra.mxu0 0.0
    %1204 = vmatprep.subr.mxu0 0.0
    %1205 = vmatpush1.msra.mxu0 0.0
    %1206 = vmatprep.subr.mxu0 0.0
    %1207 = vmatpush1.msra.mxu0 0.0
    %1208 = vmatprep.subr.mxu0 0.0
    %1209 = vmatpush1.msra.mxu0 0.0
    %1210 = vmatprep.subr.mxu0 0.0
    %1211 = vmatpush1.msra.mxu0 0.0
    %1212 = vmatprep.subr.mxu0 0.0
    %1213 = vmatpush1.msra.mxu0 0.0
    %1214 = vmatprep.subr.mxu0 0.0
    %1215 = vmatpush1.msra.mxu0 0.0
    %1216 = vmatprep.subr.mxu0 0.0
    %1217 = vmatpush1.msra.mxu0 0.0
    %1218 = vmatprep.subr.mxu0 0.0
    %1219 = vmatpush1.msra.mxu0 0.0
    %1220 = vmatprep.subr.mxu0 0.0
    %1221 = vmatpush1.msra.mxu0 0.0
    %1222 = vmatprep.subr.mxu0 0.0
    %1223 = vmatpush1.msra.mxu0 0.0
    %1224 = vmatprep.subr.mxu0 0.0
    %1225 = vmatpush1.msra.mxu0 0.0
    %1226 = vmatprep.subr.mxu0 0.0
    %1227 = vmatpush1.msra.mxu0 0.0
    %1228 = vmatprep.subr.mxu0 0.0
    %1229 = vmatpush1.msra.mxu0 0.0
    %1230 = vmatprep.subr.mxu0 0.0
    %1231 = vmatpush1.msra.mxu0 0.0
    %1232 = vmatprep.subr.mxu0 0.0
    %1233 = vmatpush1.msra.mxu0 0.0
    %1234 = vmatprep.subr.mxu0 0.0
    %1235 = vmatpush1.msra.mxu0 0.0
    %1236 = vmatprep.subr.mxu0 0.0
    %1237 = vmatpush1.msra.mxu0 0.0
    %1238 = vmatprep.subr.mxu0 0.0
    %1239 = vmatpush1.msra.mxu0 0.0
    %1240 = vmatprep.subr.mxu0 0.0
    %1241 = vmatpush1.msra.mxu0 0.0
    %1242 = vmatprep.subr.mxu0 0.0
    %1243 = vmatpush1.msra.mxu0 0.0
    %1244 = vmatprep.subr.mxu0 0.0
    %1245 = vmatpush1.msra.mxu0 0.0
    %1246 = vmatprep.subr.mxu0 0.0
    %1247 = vmatpush1.msra.mxu0 0.0
    %1248 = vmatprep.mubr.f32.mxu0 0.0
    %1249 = vmatmul.mubr.f32.gmra.mrb[0].mxu0 %v1179
    %v1250 = vpop.f32.mrb[0].mxu0
    %v1251 = vadd.f32 0.0, %v1250
    %v1252 = vpop.f32.mrb[0].mxu0
    %1253 = vmatprep.mubr.f32.mxu0 0.0
    %1254 = vmatmul.mubr.f32.gmra.mrb[0].mxu0 %v1182
    %v1255 = vpop.f32.mrb[0].mxu0
    %v1256 = vadd.f32 0.0, %v1255
    %v1257 = vpop.f32.mrb[0].mxu0
    %1258 = vdwg.mxu0
    %s1259 = scalar_lea.vmem %s8, 128
    %v1260 = vld [vmem:[%s1259] sm:$0xff]
    %v1261 = vld [vmem:[%s1259 + $0x8] sm:$0xff]
    %v1262 = vld [vmem:[%s1259 + $0x10] sm:$0xff]
    %v1263 = vld [vmem:[%s1259 + $0x18] sm:$0xff]
    %v1264 = vld [vmem:[%s1259 + $0x20] sm:$0xff]
    %v1265 = vld [vmem:[%s1259 + $0x28] sm:$0xff]
    %v1266 = vld [vmem:[%s1259 + $0x30] sm:$0xff]
    %v1267 = vld [vmem:[%s1259 + $0x38] sm:$0xff]
    %v1268 = vld [vmem:[%s1259 + $0x40] sm:$0xff]
    %v1269 = vld [vmem:[%s1259 + $0x48] sm:$0xff]
    %v1270 = vld [vmem:[%s1259 + $0x50] sm:$0xff]
    %v1271 = vld [vmem:[%s1259 + $0x58] sm:$0xff]
    %v1272 = vld [vmem:[%s1259 + $0x60] sm:$0xff]
    %v1273 = vld [vmem:[%s1259 + $0x68] sm:$0xff]
    %v1274 = vld [vmem:[%s1259 + $0x70] sm:$0xff]
    %v1275 = vld [vmem:[%s1259 + $0x78] sm:$0xff]
    %s1276 = scalar_lea.vmem %s9, 1
    %v1277 = vld [vmem:[%s1276] sm:$0x1]
    %v1279 = vlaneseq
    %v1280 = vshrl.u32 %v1279, 7
    %v1281 = vsub.s32 0, %v1280
    %v1282 = vrot.slane %v1277, %v1281
    %1284 = vmatprep.subr.mxu0 0.0
    %1285 = vmatpush1.msra.mxu0 %v1260
    %1286 = vmatprep.subr.mxu0 0.0
    %1287 = vmatpush1.msra.mxu0 %v1261
    %1288 = vmatprep.subr.mxu0 0.0
    %1289 = vmatpush1.msra.mxu0 %v1262
    %1290 = vmatprep.subr.mxu0 0.0
    %1291 = vmatpush1.msra.mxu0 %v1263
    %1292 = vmatprep.subr.mxu0 0.0
    %1293 = vmatpush1.msra.mxu0 %v1264
    %1294 = vmatprep.subr.mxu0 0.0
    %1295 = vmatpush1.msra.mxu0 %v1265
    %1296 = vmatprep.subr.mxu0 0.0
    %1297 = vmatpush1.msra.mxu0 %v1266
    %1298 = vmatprep.subr.mxu0 0.0
    %1299 = vmatpush1.msra.mxu0 %v1267
    %1300 = vmatprep.subr.mxu0 0.0
    %1301 = vmatpush1.msra.mxu0 %v1268
    %1302 = vmatprep.subr.mxu0 0.0
    %1303 = vmatpush1.msra.mxu0 %v1269
    %1304 = vmatprep.subr.mxu0 0.0
    %1305 = vmatpush1.msra.mxu0 %v1270
    %1306 = vmatprep.subr.mxu0 0.0
    %1307 = vmatpush1.msra.mxu0 %v1271
    %1308 = vmatprep.subr.mxu0 0.0
    %1309 = vmatpush1.msra.mxu0 %v1272
    %1310 = vmatprep.subr.mxu0 0.0
    %1311 = vmatpush1.msra.mxu0 %v1273
    %1312 = vmatprep.subr.mxu0 0.0
    %1313 = vmatpush1.msra.mxu0 %v1274
    %1314 = vmatprep.subr.mxu0 0.0
    %1315 = vmatpush1.msra.mxu0 %v1275
    %1316 = vmatprep.subr.mxu0 0.0
    %1317 = vmatpush1.msra.mxu0 0.0
    %1318 = vmatprep.subr.mxu0 0.0
    %1319 = vmatpush1.msra.mxu0 0.0
    %1320 = vmatprep.subr.mxu0 0.0
    %1321 = vmatpush1.msra.mxu0 0.0
    %1322 = vmatprep.subr.mxu0 0.0
    %1323 = vmatpush1.msra.mxu0 0.0
    %1324 = vmatprep.subr.mxu0 0.0
    %1325 = vmatpush1.msra.mxu0 0.0
    %1326 = vmatprep.subr.mxu0 0.0
    %1327 = vmatpush1.msra.mxu0 0.0
    %1328 = vmatprep.subr.mxu0 0.0
    %1329 = vmatpush1.msra.mxu0 0.0
    %1330 = vmatprep.subr.mxu0 0.0
    %1331 = vmatpush1.msra.mxu0 0.0
    %1332 = vmatprep.subr.mxu0 0.0
    %1333 = vmatpush1.msra.mxu0 0.0
    %1334 = vmatprep.subr.mxu0 0.0
    %1335 = vmatpush1.msra.mxu0 0.0
    %1336 = vmatprep.subr.mxu0 0.0
    %1337 = vmatpush1.msra.mxu0 0.0
    %1338 = vmatprep.subr.mxu0 0.0
    %1339 = vmatpush1.msra.mxu0 0.0
    %1340 = vmatprep.subr.mxu0 0.0
    %1341 = vmatpush1.msra.mxu0 0.0
    %1342 = vmatprep.subr.mxu0 0.0
    %1343 = vmatpush1.msra.mxu0 0.0
    %1344 = vmatprep.subr.mxu0 0.0
    %1345 = vmatpush1.msra.mxu0 0.0
    %1346 = vmatprep.subr.mxu0 0.0
    %1347 = vmatpush1.msra.mxu0 0.0
    %1348 = vmatprep.mubr.f32.mxu0 0.0
    %1349 = vmatmul.mubr.f32.gmra.mrb[0].mxu0 %v1251
    %v1350 = vpop.f32.mrb[0].mxu0
    %v1351 = vadd.f32 %v1282, %v1350
    %v1352 = vpop.f32.mrb[0].mxu0
    %1353 = vmatprep.mubr.f32.mxu0 0.0
    %1354 = vmatmul.mubr.f32.gmra.mrb[0].mxu0 %v1256
    %v1355 = vpop.f32.mrb[0].mxu0
    %v1356 = vadd.f32 %v1282, %v1355
    %v1357 = vpop.f32.mrb[0].mxu0
    %1358 = vdwg.mxu0
    %v1359 = vadd.f32 %v898, %v1351
    %v1360 = vadd.f32 %v899, %v1356
    %s1361 = scalar_lea.vmem %s10, 1
    %v1362 = vld [vmem:[%s1361] sm:$0x1]
    %s1363 = scalar_lea.vmem %s11, 1
    %v1364 = vld [vmem:[%s1363] sm:$0x1]
    %v1365 = vsel %vm79, %v1359, 0.0
    %1366 = vadd.xlane.f32.xlu0 %v1365
    %v1367 = vpop.xlane.xlu0 %1366
    %v1368 = vsel %vm79, %v1360, 0.0
    %1369 = vadd.xlane.f32.xlu0 %v1368
    %v1370 = vpop.xlane.xlu0 %1369
    %v1371 = vmul.f32 %v1359, %v1359
    %v1372 = vmul.f32 %v1360, %v1360
    %v1373 = vsel %vm79, %v1371, 0.0
    %1374 = vadd.xlane.f32.xlu0 %v1373
    %v1375 = vpop.xlane.xlu0 %1374
    %v1376 = vsel %vm79, %v1372, 0.0
    %1377 = vadd.xlane.f32.xlu0 %v1376
    %v1378 = vpop.xlane.xlu0 %1377
    %v1379 = vmul.f32 %v1367, 0.03125
    %v1380 = vmul.f32 %v1370, 0.03125
    %v1381 = vmul.f32 %v1375, 0.03125
    %v1382 = vmul.f32 %v1378, 0.03125
    %v1383 = vmul.f32 %v1379, %v1379
    %v1384 = vmul.f32 %v1380, %v1380
    %v1385 = vsub.f32 %v1381, %v1383
    %v1386 = vsub.f32 %v1382, %v1384
    %v1387 = vsub.f32 %v1359, %v1379
    %v1388 = vsub.f32 %v1360, %v1380
    %v1389 = vadd.f32 %v1385, 1e-05
    %v1390 = vadd.f32 %v1386, 1e-05
    %v1391 = vrsqrt.pop %v1389
    %v1392 = vrsqrt.pop %v1390
    %v1393 = vmul.f32 %v1387, %v1391
    %v1394 = vmul.f32 %v1388, %v1392
    %v1396 = vlaneseq
    %v1397 = vshrl.u32 %v1396, 7
    %v1398 = vsub.s32 0, %v1397
    %v1399 = vrot.slane %v1362, %v1398
    %v1401 = vmul.f32 %v1393, %v1399
    %v1402 = vmul.f32 %v1394, %v1399
    %v1404 = vlaneseq
    %v1405 = vshrl.u32 %v1404, 7
    %v1406 = vsub.s32 0, %v1405
    %v1407 = vrot.slane %v1364, %v1406
    %v1409 = vadd.f32 %v1401, %v1407
    %v1410 = vadd.f32 %v1402, %v1407
    %s1411 = scalar_lea.vmem %s12, 32
    %v1412 = vld [vmem:[%s1411] sm:$0xff]
    %v1413 = vld [vmem:[%s1411 + $0x8] sm:$0xff]
    %v1414 = vld [vmem:[%s1411 + $0x10] sm:$0xff]
    %v1415 = vld [vmem:[%s1411 + $0x18] sm:$0xff]
    %s1416 = scalar_lea.vmem %s13, 1
    %v1417 = vld [vmem:[%s1416] sm:$0x1]
    %v1419 = vlaneseq
    %v1420 = vshrl.u32 %v1419, 7
    %v1421 = vsub.s32 0, %v1420
    %v1422 = vrot.slane %v1417, %v1421
    %v1425 = vsel %vm79, %v1409, 0
    %v1428 = vsel %vm79, %v1410, 0
    %1430 = vmatprep.subr.mxu0 0.0
    %1431 = vmatpush1.msra.mxu0 %v1412
    %1432 = vmatprep.subr.mxu0 0.0
    %1433 = vmatpush1.msra.mxu0 %v1413
    %1434 = vmatprep.subr.mxu0 0.0
    %1435 = vmatpush1.msra.mxu0 %v1414
    %1436 = vmatprep.subr.mxu0 0.0
    %1437 = vmatpush1.msra.mxu0 %v1415
    %1438 = vmatprep.subr.mxu0 0.0
    %1439 = vmatpush1.msra.mxu0 0.0
    %1440 = vmatprep.subr.mxu0 0.0
    %1441 = vmatpush1.msra.mxu0 0.0
    %1442 = vmatprep.subr.mxu0 0.0
    %1443 = vmatpush1.msra.mxu0 0.0
    %1444 = vmatprep.subr.mxu0 0.0
    %1445 = vmatpush1.msra.mxu0 0.0
    %1446 = vmatprep.subr.mxu0 0.0
    %1447 = vmatpush1.msra.mxu0 0.0
    %1448 = vmatprep.subr.mxu0 0.0
    %1449 = vmatpush1.msra.mxu0 0.0
    %1450 = vmatprep.subr.mxu0 0.0
    %1451 = vmatpush1.msra.mxu0 0.0
    %1452 = vmatprep.subr.mxu0 0.0
    %1453 = vmatpush1.msra.mxu0 0.0
    %1454 = vmatprep.subr.mxu0 0.0
    %1455 = vmatpush1.msra.mxu0 0.0
    %1456 = vmatprep.subr.mxu0 0.0
    %1457 = vmatpush1.msra.mxu0 0.0
    %1458 = vmatprep.subr.mxu0 0.0
    %1459 = vmatpush1.msra.mxu0 0.0
    %1460 = vmatprep.subr.mxu0 0.0
    %1461 = vmatpush1.msra.mxu0 0.0
    %1462 = vmatprep.subr.mxu0 0.0
    %1463 = vmatpush1.msra.mxu0 0.0
    %1464 = vmatprep.subr.mxu0 0.0
    %1465 = vmatpush1.msra.mxu0 0.0
    %1466 = vmatprep.subr.mxu0 0.0
    %1467 = vmatpush1.msra.mxu0 0.0
    %1468 = vmatprep.subr.mxu0 0.0
    %1469 = vmatpush1.msra.mxu0 0.0
    %1470 = vmatprep.subr.mxu0 0.0
    %1471 = vmatpush1.msra.mxu0 0.0
    %1472 = vmatprep.subr.mxu0 0.0
    %1473 = vmatpush1.msra.mxu0 0.0
    %1474 = vmatprep.subr.mxu0 0.0
    %1475 = vmatpush1.msra.mxu0 0.0
    %1476 = vmatprep.subr.mxu0 0.0
    %1477 = vmatpush1.msra.mxu0 0.0
    %1478 = vmatprep.subr.mxu0 0.0
    %1479 = vmatpush1.msra.mxu0 0.0
    %1480 = vmatprep.subr.mxu0 0.0
    %1481 = vmatpush1.msra.mxu0 0.0
    %1482 = vmatprep.subr.mxu0 0.0
    %1483 = vmatpush1.msra.mxu0 0.0
    %1484 = vmatprep.subr.mxu0 0.0
    %1485 = vmatpush1.msra.mxu0 0.0
    %1486 = vmatprep.subr.mxu0 0.0
    %1487 = vmatpush1.msra.mxu0 0.0
    %1488 = vmatprep.subr.mxu0 0.0
    %1489 = vmatpush1.msra.mxu0 0.0
    %1490 = vmatprep.subr.mxu0 0.0
    %1491 = vmatpush1.msra.mxu0 0.0
    %1492 = vmatprep.subr.mxu0 0.0
    %1493 = vmatpush1.msra.mxu0 0.0
    %1494 = vmatprep.mubr.f32.mxu0 0.0
    %1495 = vmatmul.mubr.f32.gmra.mrb[0].mxu0 %v1425
    %v1496 = vpop.f32.mrb[0].mxu0
    %v1497 = vadd.f32 %v1422, %v1496
    %v1498 = vpop.f32.mrb[0].mxu0
    %1499 = vmatprep.mubr.f32.mxu0 0.0
    %1500 = vmatmul.mubr.f32.gmra.mrb[0].mxu0 %v1428
    %v1501 = vpop.f32.mrb[0].mxu0
    %v1502 = vadd.f32 %v1422, %v1501
    %v1503 = vpop.f32.mrb[0].mxu0
    %1504 = vdwg.mxu0
    %v1505 = vmul.f32 %v1497, %v1497
    %v1506 = vmul.f32 %v1502, %v1502
    %v1507 = vmul.f32 %v1497, %v1505
    %v1508 = vmul.f32 %v1502, %v1506
    %v1509 = vmul.f32 %v1507, 0.044715
    %v1510 = vmul.f32 %v1508, 0.044715
    %v1511 = vadd.f32 %v1497, %v1509
    %v1512 = vadd.f32 %v1502, %v1510
    %v1513 = vmul.f32 %v1511, 0.7978846
    %v1514 = vmul.f32 %v1512, 0.7978846
    %v1515 = vtanh.pop %v1513
    %v1516 = vtanh.pop %v1514
    %v1517 = vadd.f32 %v1515, 1.0
    %v1518 = vadd.f32 %v1516, 1.0
    %v1519 = vmul.f32 %v1517, 0.5
    %v1520 = vmul.f32 %v1518, 0.5
    %v1521 = vmul.f32 %v1497, %v1519
    %v1522 = vmul.f32 %v1502, %v1520
    %s1523 = scalar_lea.vmem %s14, 64
    %v1524 = vld [vmem:[%s1523] sm:$0xff]
    %v1525 = vld [vmem:[%s1523 + $0x8] sm:$0xff]
    %v1526 = vld [vmem:[%s1523 + $0x10] sm:$0xff]
    %v1527 = vld [vmem:[%s1523 + $0x18] sm:$0xff]
    %v1528 = vld [vmem:[%s1523 + $0x20] sm:$0xff]
    %v1529 = vld [vmem:[%s1523 + $0x28] sm:$0xff]
    %v1530 = vld [vmem:[%s1523 + $0x30] sm:$0xff]
    %v1531 = vld [vmem:[%s1523 + $0x38] sm:$0xff]
    %s1532 = scalar_lea.vmem %s15, 1
    %v1533 = vld [vmem:[%s1532] sm:$0x1]
    %v1535 = vlaneseq
    %v1536 = vshrl.u32 %v1535, 7
    %v1537 = vsub.s32 0, %v1536
    %v1538 = vrot.slane %v1533, %v1537
    %v1541 = vsel %vm768, %v1521, 0
    %v1544 = vsel %vm768, %v1522, 0
    %1546 = vmatprep.subr.mxu0 0.0
    %1547 = vmatpush1.msra.mxu0 %v1524
    %1548 = vmatprep.subr.mxu0 0.0
    %1549 = vmatpush1.msra.mxu0 %v1525
    %1550 = vmatprep.subr.mxu0 0.0
    %1551 = vmatpush1.msra.mxu0 %v1526
    %1552 = vmatprep.subr.mxu0 0.0
    %1553 = vmatpush1.msra.mxu0 %v1527
    %1554 = vmatprep.subr.mxu0 0.0
    %1555 = vmatpush1.msra.mxu0 %v1528
    %1556 = vmatprep.subr.mxu0 0.0
    %1557 = vmatpush1.msra.mxu0 %v1529
    %1558 = vmatprep.subr.mxu0 0.0
    %1559 = vmatpush1.msra.mxu0 %v1530
    %1560 = vmatprep.subr.mxu0 0.0
    %1561 = vmatpush1.msra.mxu0 %v1531
    %1562 = vmatprep.subr.mxu0 0.0
    %1563 = vmatpush1.msra.mxu0 0.0
    %1564 = vmatprep.subr.mxu0 0.0
    %1565 = vmatpush1.msra.mxu0 0.0
    %1566 = vmatprep.subr.mxu0 0.0
    %1567 = vmatpush1.msra.mxu0 0.0
    %1568 = vmatprep.subr.mxu0 0.0
    %1569 = vmatpush1.msra.mxu0 0.0
    %1570 = vmatprep.subr.mxu0 0.0
    %1571 = vmatpush1.msra.mxu0 0.0
    %1572 = vmatprep.subr.mxu0 0.0
    %1573 = vmatpush1.msra.mxu0 0.0
    %1574 = vmatprep.subr.mxu0 0.0
    %1575 = vmatpush1.msra.mxu0 0.0
    %1576 = vmatprep.subr.mxu0 0.0
    %1577 = vmatpush1.msra.mxu0 0.0
    %1578 = vmatprep.subr.mxu0 0.0
    %1579 = vmatpush1.msra.mxu0 0.0
    %1580 = vmatprep.subr.mxu0 0.0
    %1581 = vmatpush1.msra.mxu0 0.0
    %1582 = vmatprep.subr.mxu0 0.0
    %1583 = vmatpush1.msra.mxu0 0.0
    %1584 = vmatprep.subr.mxu0 0.0
    %1585 = vmatpush1.msra.mxu0 0.0
    %1586 = vmatprep.subr.mxu0 0.0
    %1587 = vmatpush1.msra.mxu0 0.0
    %1588 = vmatprep.subr.mxu0 0.0
    %1589 = vmatpush1.msra.mxu0 0.0
    %1590 = vmatprep.subr.mxu0 0.0
    %1591 = vmatpush1.msra.mxu0 0.0
    %1592 = vmatprep.subr.mxu0 0.0
    %1593 = vmatpush1.msra.mxu0 0.0
    %1594 = vmatprep.subr.mxu0 0.0
    %1595 = vmatpush1.msra.mxu0 0.0
    %1596 = vmatprep.subr.mxu0 0.0
    %1597 = vmatpush1.msra.mxu0 0.0
    %1598 = vmatprep.subr.mxu0 0.0
    %1599 = vmatpush1.msra.mxu0 0.0
    %1600 = vmatprep.subr.mxu0 0.0
    %1601 = vmatpush1.msra.mxu0 0.0
    %1602 = vmatprep.subr.mxu0 0.0
    %1603 = vmatpush1.msra.mxu0 0.0
    %1604 = vmatprep.subr.mxu0 0.0
    %1605 = vmatpush1.msra.mxu0 0.0
    %1606 = vmatprep.subr.mxu0 0.0
    %1607 = vmatpush1.msra.mxu0 0.0
    %1608 = vmatprep.subr.mxu0 0.0
    %1609 = vmatpush1.msra.mxu0 0.0
    %1610 = vmatprep.mubr.f32.mxu0 0.0
    %1611 = vmatmul.mubr.f32.gmra.mrb[0].mxu0 %v1541
    %v1612 = vpop.f32.mrb[0].mxu0
    %v1613 = vadd.f32 %v1538, %v1612
    %v1614 = vpop.f32.mrb[0].mxu0
    %1615 = vmatprep.mubr.f32.mxu0 0.0
    %1616 = vmatmul.mubr.f32.gmra.mrb[0].mxu0 %v1544
    %v1617 = vpop.f32.mrb[0].mxu0
    %v1618 = vadd.f32 %v1538, %v1617
    %v1619 = vpop.f32.mrb[0].mxu0
    %1620 = vdwg.mxu0
    %v1621 = vadd.f32 %v1409, %v1613
    %v1622 = vadd.f32 %v1410, %v1618
    %s1623 = scalar_lea.vmem %s16, 1
    %v1624 = vld [vmem:[%s1623] sm:$0x1]
    %s1625 = scalar_lea.vmem %s17, 1
    %v1626 = vld [vmem:[%s1625] sm:$0x1]
    %v1627 = vsel %vm79, %v1621, 0.0
    %1628 = vadd.xlane.f32.xlu0 %v1627
    %v1629 = vpop.xlane.xlu0 %1628
    %v1630 = vsel %vm79, %v1622, 0.0
    %1631 = vadd.xlane.f32.xlu0 %v1630
    %v1632 = vpop.xlane.xlu0 %1631
    %v1633 = vmul.f32 %v1621, %v1621
    %v1634 = vmul.f32 %v1622, %v1622
    %v1635 = vsel %vm79, %v1633, 0.0
    %1636 = vadd.xlane.f32.xlu0 %v1635
    %v1637 = vpop.xlane.xlu0 %1636
    %v1638 = vsel %vm79, %v1634, 0.0
    %1639 = vadd.xlane.f32.xlu0 %v1638
    %v1640 = vpop.xlane.xlu0 %1639
    %v1641 = vmul.f32 %v1629, 0.03125
    %v1642 = vmul.f32 %v1632, 0.03125
    %v1643 = vmul.f32 %v1637, 0.03125
    %v1644 = vmul.f32 %v1640, 0.03125
    %v1645 = vmul.f32 %v1641, %v1641
    %v1646 = vmul.f32 %v1642, %v1642
    %v1647 = vsub.f32 %v1643, %v1645
    %v1648 = vsub.f32 %v1644, %v1646
    %v1649 = vsub.f32 %v1621, %v1641
    %v1650 = vsub.f32 %v1622, %v1642
    %v1651 = vadd.f32 %v1647, 1e-05
    %v1652 = vadd.f32 %v1648, 1e-05
    %v1653 = vrsqrt.pop %v1651
    %v1654 = vrsqrt.pop %v1652
    %v1655 = vmul.f32 %v1649, %v1653
    %v1656 = vmul.f32 %v1650, %v1654
    %v1658 = vlaneseq
    %v1659 = vshrl.u32 %v1658, 7
    %v1660 = vsub.s32 0, %v1659
    %v1661 = vrot.slane %v1624, %v1660
    %v1663 = vmul.f32 %v1655, %v1661
    %v1664 = vmul.f32 %v1656, %v1661
    %v1666 = vlaneseq
    %v1667 = vshrl.u32 %v1666, 7
    %v1668 = vsub.s32 0, %v1667
    %v1669 = vrot.slane %v1626, %v1668
    %v1671 = vadd.f32 %v1663, %v1669
    %v1672 = vadd.f32 %v1664, %v1669
    %v1673 = vld [vmem:[%s18] sm:$0xff]
    %v1674 = vld [vmem:[%s18 + $0x8] sm:$0xff]
    %v1675 = vld [vmem:[%s18 + $0x10] sm:$0xff]
    %v1676 = vld [vmem:[%s18 + $0x18] sm:$0xff]
    %v1677 = vld [vmem:[%s19] sm:$0x1]
    %v1679 = vlaneseq
    %v1680 = vshrl.u32 %v1679, 7
    %v1681 = vsub.s32 0, %v1680
    %v1682 = vrot.slane %v1677, %v1681
    %v1686 = vrot.slane %v1672, 7
    %vm1687 = vcmask 1041409
    %v1688 = vsel %vm1687, %v1686, %v1671
    %v1689 = vsel %vm79, %v1688, 0
    %1691 = vmatprep.subr.mxu0 0.0
    %1692 = vmatpush1.msra.mxu0 %v1673
    %1693 = vmatprep.subr.mxu0 0.0
    %1694 = vmatpush1.msra.mxu0 %v1674
    %1695 = vmatprep.subr.mxu0 0.0
    %1696 = vmatpush1.msra.mxu0 %v1675
    %1697 = vmatprep.subr.mxu0 0.0
    %1698 = vmatpush1.msra.mxu0 %v1676
    %1699 = vmatprep.subr.mxu0 0.0
    %1700 = vmatpush1.msra.mxu0 0.0
    %1701 = vmatprep.subr.mxu0 0.0
    %1702 = vmatpush1.msra.mxu0 0.0
    %1703 = vmatprep.subr.mxu0 0.0
    %1704 = vmatpush1.msra.mxu0 0.0
    %1705 = vmatprep.subr.mxu0 0.0
    %1706 = vmatpush1.msra.mxu0 0.0
    %1707 = vmatprep.subr.mxu0 0.0
    %1708 = vmatpush1.msra.mxu0 0.0
    %1709 = vmatprep.subr.mxu0 0.0
    %1710 = vmatpush1.msra.mxu0 0.0
    %1711 = vmatprep.subr.mxu0 0.0
    %1712 = vmatpush1.msra.mxu0 0.0
    %1713 = vmatprep.subr.mxu0 0.0
    %1714 = vmatpush1.msra.mxu0 0.0
    %1715 = vmatprep.subr.mxu0 0.0
    %1716 = vmatpush1.msra.mxu0 0.0
    %1717 = vmatprep.subr.mxu0 0.0
    %1718 = vmatpush1.msra.mxu0 0.0
    %1719 = vmatprep.subr.mxu0 0.0
    %1720 = vmatpush1.msra.mxu0 0.0
    %1721 = vmatprep.subr.mxu0 0.0
    %1722 = vmatpush1.msra.mxu0 0.0
    %1723 = vmatprep.subr.mxu0 0.0
    %1724 = vmatpush1.msra.mxu0 0.0
    %1725 = vmatprep.subr.mxu0 0.0
    %1726 = vmatpush1.msra.mxu0 0.0
    %1727 = vmatprep.subr.mxu0 0.0
    %1728 = vmatpush1.msra.mxu0 0.0
    %1729 = vmatprep.subr.mxu0 0.0
    %1730 = vmatpush1.msra.mxu0 0.0
    %1731 = vmatprep.subr.mxu0 0.0
    %1732 = vmatpush1.msra.mxu0 0.0
    %1733 = vmatprep.subr.mxu0 0.0
    %1734 = vmatpush1.msra.mxu0 0.0
    %1735 = vmatprep.subr.mxu0 0.0
    %1736 = vmatpush1.msra.mxu0 0.0
    %1737 = vmatprep.subr.mxu0 0.0
    %1738 = vmatpush1.msra.mxu0 0.0
    %1739 = vmatprep.subr.mxu0 0.0
    %1740 = vmatpush1.msra.mxu0 0.0
    %1741 = vmatprep.subr.mxu0 0.0
    %1742 = vmatpush1.msra.mxu0 0.0
    %1743 = vmatprep.subr.mxu0 0.0
    %1744 = vmatpush1.msra.mxu0 0.0
    %1745 = vmatprep.subr.mxu0 0.0
    %1746 = vmatpush1.msra.mxu0 0.0
    %1747 = vmatprep.subr.mxu0 0.0
    %1748 = vmatpush1.msra.mxu0 0.0
    %1749 = vmatprep.subr.mxu0 0.0
    %1750 = vmatpush1.msra.mxu0 0.0
    %1751 = vmatprep.subr.mxu0 0.0
    %1752 = vmatpush1.msra.mxu0 0.0
    %1753 = vmatprep.subr.mxu0 0.0
    %1754 = vmatpush1.msra.mxu0 0.0
    %1755 = vmatprep.mubr.f32.mxu0 0.0
    %1756 = vmatmul.mubr.f32.gmra.mrb[0].mxu0 %v1689
    %v1757 = vpop.f32.mrb[0].mxu0
    %v1758 = vadd.f32 %v1682, %v1757
    %v1759 = vpop.f32.mrb[0].mxu0
    %1760 = vdwg.mxu0
    %v1761 = vtanh.pop %v1758
    %v1762 = vld [vmem:[%s20] sm:$0xff]
    %v1763 = vld [vmem:[%s20 + $0x8] sm:$0xff]
    %v1764 = vld [vmem:[%s20 + $0x10] sm:$0xff]
    %v1765 = vld [vmem:[%s20 + $0x18] sm:$0xff]
    %v1766 = vld [vmem:[%s21] sm:$0x1]
    %v1768 = vlaneseq
    %v1769 = vshrl.u32 %v1768, 7
    %v1770 = vsub.s32 0, %v1769
    %v1771 = vrot.slane %v1766, %v1770
    %v1774 = vsel %vm79, %v1761, 0
    %1776 = vmatprep.subr.mxu0 0.0
    %1777 = vmatpush1.msra.mxu0 %v1762
    %1778 = vmatprep.subr.mxu0 0.0
    %1779 = vmatpush1.msra.mxu0 %v1763
    %1780 = vmatprep.subr.mxu0 0.0
    %1781 = vmatpush1.msra.mxu0 %v1764
    %1782 = vmatprep.subr.mxu0 0.0
    %1783 = vmatpush1.msra.mxu0 %v1765
    %1784 = vmatprep.subr.mxu0 0.0
    %1785 = vmatpush1.msra.mxu0 0.0
    %1786 = vmatprep.subr.mxu0 0.0
    %1787 = vmatpush1.msra.mxu0 0.0
    %1788 = vmatprep.subr.mxu0 0.0
    %1789 = vmatpush1.msra.mxu0 0.0
    %1790 = vmatprep.subr.mxu0 0.0
    %1791 = vmatpush1.msra.mxu0 0.0
    %1792 = vmatprep.subr.mxu0 0.0
    %1793 = vmatpush1.msra.mxu0 0.0
    %1794 = vmatprep.subr.mxu0 0.0
    %1795 = vmatpush1.msra.mxu0 0.0
    %1796 = vmatprep.subr.mxu0 0.0
    %1797 = vmatpush1.msra.mxu0 0.0
    %1798 = vmatprep.subr.mxu0 0.0
    %1799 = vmatpush1.msra.mxu0 0.0
    %1800 = vmatprep.subr.mxu0 0.0
    %1801 = vmatpush1.msra.mxu0 0.0
    %1802 = vmatprep.subr.mxu0 0.0
    %1803 = vmatpush1.msra.mxu0 0.0
    %1804 = vmatprep.subr.mxu0 0.0
    %1805 = vmatpush1.msra.mxu0 0.0
    %1806 = vmatprep.subr.mxu0 0.0
    %1807 = vmatpush1.msra.mxu0 0.0
    %1808 = vmatprep.subr.mxu0 0.0
    %1809 = vmatpush1.msra.mxu0 0.0
    %1810 = vmatprep.subr.mxu0 0.0
    %1811 = vmatpush1.msra.mxu0 0.0
    %1812 = vmatprep.subr.mxu0 0.0
    %1813 = vmatpush1.msra.mxu0 0.0
    %1814 = vmatprep.subr.mxu0 0.0
    %1815 = vmatpush1.msra.mxu0 0.0
    %1816 = vmatprep.subr.mxu0 0.0
    %1817 = vmatpush1.msra.mxu0 0.0
    %1818 = vmatprep.subr.mxu0 0.0
    %1819 = vmatpush1.msra.mxu0 0.0
    %1820 = vmatprep.subr.mxu0 0.0
    %1821 = vmatpush1.msra.mxu0 0.0
    %1822 = vmatprep.subr.mxu0 0.0
    %1823 = vmatpush1.msra.mxu0 0.0
    %1824 = vmatprep.subr.mxu0 0.0
    %1825 = vmatpush1.msra.mxu0 0.0
    %1826 = vmatprep.subr.mxu0 0.0
    %1827 = vmatpush1.msra.mxu0 0.0
    %1828 = vmatprep.subr.mxu0 0.0
    %1829 = vmatpush1.msra.mxu0 0.0
    %1830 = vmatprep.subr.mxu0 0.0
    %1831 = vmatpush1.msra.mxu0 0.0
    %1832 = vmatprep.subr.mxu0 0.0
    %1833 = vmatpush1.msra.mxu0 0.0
    %1834 = vmatprep.subr.mxu0 0.0
    %1835 = vmatpush1.msra.mxu0 0.0
    %1836 = vmatprep.subr.mxu0 0.0
    %1837 = vmatpush1.msra.mxu0 0.0
    %1838 = vmatprep.subr.mxu0 0.0
    %1839 = vmatpush1.msra.mxu0 0.0
    %1840 = vmatprep.mubr.f32.mxu0 0.0
    %1841 = vmatmul.mubr.f32.gmra.mrb[0].mxu0 %v1774
    %v1842 = vpop.f32.mrb[0].mxu0
    %v1843 = vadd.f32 %v1771, %v1842
    %v1844 = vpop.f32.mrb[0].mxu0
    %1845 = vdwg.mxu0
    %1846 = vst [vmem:[#allocation2] sm:$0x3] %v1843
    // Predicated region
    $region90: #{tpu_custom_call.1} parent=1 // pred_check
      _
    $region91: #{tpu_custom_call.1} parent=1 // pred_check_branch
      %1848 = sbr.rel (0) target = $region93
    $region92: #{tpu_custom_call.1} parent=1 // pred_region
      %s1850 = ssub.s32 32, 32
      %1851 = vsyncadd [#allocation3], %s1850
      %s1853 = sshll.u32 [#allocation2], 4
      %s1854 = int_to_ptr.vmem [resolvable:$true] %s1853
      %1856 = dma.vmem_to_hbm [thread:$0]  %s1854, 32, %s22, [#allocation3]
    $region93: #{tpu_custom_call.1} parent=1 // pred_fallthru
      _
    // Predicated region
    $region94: #{tpu_custom_call.1} parent=1 // pred_check
      _
    $region95: #{tpu_custom_call.1} parent=1 // pred_check_branch
      %1858 = sbr.rel (0) target = $region97
    $region96: #{tpu_custom_call.1} parent=1 // pred_region
      %1859 = dma.done [#allocation3], 32
    $region97: #{tpu_custom_call.1} parent=1 // pred_fallthru
      _
    %1860 = vsyncpa [#allocation3], 1

</llo_original>
